<compile_context>
chip_gen: v7x
topology: tpu7x:2x2x1
jax: 0.10.0
libtpu: 0.0.40
codegen_flags: <defaults>
</compile_context>

<pallas_src>
import jax
import jax.numpy as jnp
from jax.experimental import pallas as pl
from jax.experimental.pallas import tpu as pltpu


def _round_up(x, m):
    return ((x + m - 1) // m) * m


def dgi_loss(x1, x2, w, bias, *, block_rows=512, interpret=False):
    """DGI discriminator loss.

    x1: [N1, E] positive node embeddings
    x2: [N2, E] corrupted node embeddings
    w : [E, E]  bilinear weight (single output slice of nn.Bilinear's [1,E,E])
    bias: scalar bilinear bias
    Returns scalar f32 loss == BCEWithLogits(cat(d1, d2), cat(ones, zeros)).
    """
    n1, e = x1.shape
    n2, e2 = x2.shape
    assert e == e2 and w.shape == (e, e)

    # Stream x1/x2 in their native (promoted) dtype -- no forced f32 HBM pass.
    # If callers hand in bf16 embeddings, the scoring matvec runs in bf16 on the
    # MXU while all accumulation (mean, loss) stays f32.
    sdtype = jnp.promote_types(x1.dtype, x2.dtype)
    if x1.dtype != sdtype:
        x1 = x1.astype(sdtype)
    if x2.dtype != sdtype:
        x2 = x2.astype(sdtype)
    b = jnp.asarray(bias, jnp.float32).reshape(1, 1)

    # Row-tile sizes: multiples of 8 sublanes, never much larger than the array.
    tm1 = max(8, min(_round_up(block_rows, 8), _round_up(n1, 8)))
    tm2 = max(8, min(_round_up(block_rows, 8), _round_up(n2, 8)))
    t1 = -(-n1 // tm1)
    t2 = -(-n2 // tm2)
    num_steps = 2 * t1 + t2
    last = num_steps - 1

    def kernel(x1_ref, x2_ref, w_ref, b_ref, out_ref, sum_ref, v_ref, loss_ref):
        i = pl.program_id(0)

        @pl.when(i == 0)
        def _init():
            sum_ref[...] = jnp.zeros_like(sum_ref)
            loss_ref[...] = jnp.zeros_like(loss_ref)

        # ---- phase A: column-sum of x1 (f32 accumulation, edge rows masked) ----
        @pl.when(i < t1)
        def _sum_x1():
            tile = x1_ref[...].astype(jnp.float32)                     # (tm1, E)
            rows = i * tm1 + jax.lax.broadcasted_iota(jnp.int32, (tm1, 1), 0)
            tile = jnp.where(rows < n1, tile, 0.0)
            sum_ref[...] += jnp.sum(tile, axis=0, keepdims=True)

        # ---- boundary: v = W @ sigmoid(mean(x1)) computed exactly once ----
        @pl.when(i == t1)
        def _make_v():
            s = jax.nn.sigmoid(sum_ref[...] * jnp.float32(1.0 / n1))   # (1, E)
            wv = jnp.dot(w_ref[...].astype(jnp.float32), s.T,
                         preferred_element_type=jnp.float32)           # (E, 1)
            v_ref[...] = wv.astype(v_ref.dtype)

        # ---- phase B: stream tiles, score, accumulate BCE-with-logits ----
        def _accumulate(tile, base, nrows, negate):
            tm = tile.shape[0]
            d = jnp.dot(tile, v_ref[...],
                        preferred_element_type=jnp.float32) + b_ref[...]  # (tm, 1)
            z = -d if negate else d
            # numerically stable softplus(z) = max(z, 0) + log1p(exp(-|z|))
            l = jnp.maximum(z, 0.0) + jnp.log1p(jnp.exp(-jnp.abs(z)))
            rows = base + jax.lax.broadcasted_iota(jnp.int32, (tm, 1), 0)
            l = jnp.where(rows < nrows, l, 0.0)
            loss_ref[...] += jnp.sum(l, keepdims=True)

        @pl.when((i >= t1) & (i < 2 * t1))
        def _score_x1():        # label = 1  ->  softplus(-d)
            _accumulate(x1_ref[...], (i - t1) * tm1, n1, negate=True)

        @pl.when(i >= 2 * t1)
        def _score_x2():        # label = 0  ->  softplus(+d)
            _accumulate(x2_ref[...], (i - 2 * t1) * tm2, n2, negate=False)

        @pl.when(i == last)
        def _finalize():
            out_ref[...] = loss_ref[...] * jnp.float32(1.0 / (n1 + n2))

    # Block index maps (in block units).
    def x1_map(i):
        r = jnp.where(i < t1, i, i - t1)          # phase A, then phase B1 re-read
        r = jnp.where(i < 2 * t1, r, t1 - 1)      # hold last block (no refetch) in B2
        return (r, 0)

    def x2_map(i):
        return (jnp.maximum(i - 2 * t1, 0), 0)    # held at block 0 until phase B2

    itemsize = jnp.dtype(sdtype).itemsize
    w_bytes = e * e * jnp.dtype(w.dtype).itemsize
    # Resident W + double-buffered x1/x2 tiles + small scratch, with headroom
    # (capped so it stays valid on v7x's 64 MiB VMEM).
    vmem_needed = w_bytes + 2 * (tm1 + tm2) * e * itemsize + 4 * (3 * e + 8)
    vmem_limit = int(min(max(2 * vmem_needed, 16 * 1024 * 1024), 48 * 1024 * 1024))

    cost = pl.CostEstimate(
        flops=int(2 * e * e + 2 * (2 * n1 + n2) * e),
        transcendentals=int(e + 2 * (n1 + n2)),
        bytes_accessed=int((2 * n1 + n2) * e * itemsize + w_bytes + 4),
    )

    out = pl.pallas_call(
        kernel,
        out_shape=jax.ShapeDtypeStruct((1, 1), jnp.float32),
        grid_spec=pltpu.PrefetchScalarGridSpec(
            num_scalar_prefetch=0,
            grid=(num_steps,),
            in_specs=[
                pl.BlockSpec((tm1, e), x1_map),
                pl.BlockSpec((tm2, e), x2_map),
                pl.BlockSpec((e, e), lambda i: (0, 0)),     # W resident in VMEM
                pl.BlockSpec((1, 1), lambda i: (0, 0)),     # bias
            ],
            out_specs=pl.BlockSpec((1, 1), lambda i: (0, 0)),
            scratch_shapes=[
                pltpu.VMEM((1, e), jnp.float32),   # column-sum of x1
                pltpu.VMEM((e, 1), sdtype),        # v = W @ s (streaming dtype)
                pltpu.VMEM((1, 1), jnp.float32),   # loss accumulator
            ],
        ),
        compiler_params=pltpu.CompilerParams(
            dimension_semantics=("arbitrary",),    # sequential reduction grid
            vmem_limit_bytes=vmem_limit,
        ),
        cost_estimate=cost,
        interpret=interpret,
    )(x1, x2, w, b)
    # TODO(synk): on v7x, split the streaming grid across both TensorCores
    # (leading parallel axis / core_map) and combine the partial (sum, loss).
    return out[0, 0]


def _reference(x1, x2, w, bias):
    # Pure-JAX reference for sanity checking.
    s = jax.nn.sigmoid(jnp.mean(x1, axis=0))
    d1 = x1 @ (w @ s) + bias
    d2 = x2 @ (w @ s) + bias
    y = jnp.concatenate([d1, d2], axis=0)
    label = jnp.concatenate(
        [jnp.ones(x1.shape[0]), jnp.zeros(x2.shape[0])], axis=0)
    l = jnp.maximum(y, 0.0) - y * label + jnp.log1p(jnp.exp(-jnp.abs(y)))
    return jnp.mean(l)


if __name__ == "__main__":
    nemb = 256            # module default
    n1, n2 = 192, 320     # non-multiples of the 128-row tile: exercises masking

    key = jax.random.PRNGKey(0)
    k1, k2, kw, kb = jax.random.split(key, 4)

    x1 = jax.random.normal(k1, (n1, nemb), dtype=jnp.float32)
    x2 = jax.random.normal(k2, (n2, nemb), dtype=jnp.float32)

    # nn.Bilinear(nemb, nemb, 1): weight [1, nemb, nemb], bias [1],
    # init ~ U(-1/sqrt(nemb), 1/sqrt(nemb)). Deterministic synthetic init here.
    bound = 1.0 / jnp.sqrt(jnp.float32(nemb))
    w = jax.random.uniform(kw, (nemb, nemb), jnp.float32, -bound, bound)
    bias = jax.random.uniform(kb, (), jnp.float32, -bound, bound)

    # Small row tiles so the demo exercises multi-tile phases + double buffering.
    loss = dgi_loss(x1, x2, w, bias, block_rows=128)
    loss = jax.block_until_ready(loss)

    ref = _reference(x1, x2, w, bias)
    assert jnp.allclose(loss, ref, rtol=2e-5, atol=2e-5), (loss, ref)

    print("KERNEL_OK")
</pallas_src>

<mosaic_0001>
module attributes {stable_mosaic.version = 11 : i64} {
  func.func @kernel(%arg0: i32, %arg1: memref<128x256xf32, #tpu.memory_space<vmem>>, %arg2: memref<128x256xf32, #tpu.memory_space<vmem>>, %arg3: memref<256x256xf32, #tpu.memory_space<vmem>>, %arg4: memref<1x1xf32, #tpu.memory_space<vmem>>, %arg5: memref<1x1xf32, #tpu.memory_space<vmem>>, %arg6: memref<1x256xf32, #tpu.memory_space<vmem>>, %arg7: memref<256x1xf32, #tpu.memory_space<vmem>>, %arg8: memref<1x1xf32, #tpu.memory_space<vmem>>) attributes {dimension_semantics = [#tpu.dimension_semantics<arbitrary>], iteration_bounds = array<i64: 7>, scalar_prefetch = 0 : i64, scratch_operands = 3 : i64, tpu.core_type = #tpu.core_type<tc>, window_params = [{transform_indices = @transform_0, window_bounds = array<i64: 128, 256>}, {transform_indices = @transform_1, window_bounds = array<i64: 128, 256>}, {pipeline_mode = #tpu.pipeline_mode<synchronous>, transform_indices = @transform_2, window_bounds = array<i64: 256, 256>}, {pipeline_mode = #tpu.pipeline_mode<synchronous>, transform_indices = @transform_3, window_bounds = array<i64: 1, 1>}, {pipeline_mode = #tpu.pipeline_mode<synchronous>, transform_indices = @transform_4, window_bounds = array<i64: 1, 1>}]} {
    %c0_i32 = arith.constant 0 : i32
    %0 = arith.cmpi eq, %arg0, %c0_i32 : i32
    %1 = arith.extui %0 : i1 to i32
    %c0_i32_0 = arith.constant 0 : i32
    %2 = arith.cmpi ne, %1, %c0_i32_0 : i32
    scf.if %2 {
      %cst = arith.constant 0.000000e+00 : f32
      %20 = vector.broadcast %cst : f32 to vector<1x256xf32>
      %c0 = arith.constant 0 : index
      %c0_9 = arith.constant 0 : index
      %21 = vector.load %arg6[%c0, %c0_9] : memref<1x256xf32, #tpu.memory_space<vmem>>, vector<1x256xf32>
      tpu.vector_store %arg6[%c0, %c0_9], %20 {strides = array<i32>} : memref<1x256xf32, #tpu.memory_space<vmem>>, vector<1x256xf32>,
      %cst_10 = arith.constant 0.000000e+00 : f32
      %22 = vector.broadcast %cst_10 : f32 to vector<1x1xf32>
      %c0_11 = arith.constant 0 : index
      %c0_12 = arith.constant 0 : index
      %23 = vector.load %arg8[%c0_11, %c0_12] : memref<1x1xf32, #tpu.memory_space<vmem>>, vector<1x1xf32>
      tpu.vector_store %arg8[%c0_11, %c0_12], %22 {strides = array<i32>} : memref<1x1xf32, #tpu.memory_space<vmem>>, vector<1x1xf32>,
    } else {
    }
    %c2_i32 = arith.constant 2 : i32
    %3 = arith.cmpi slt, %arg0, %c2_i32 : i32
    %4 = arith.extui %3 : i1 to i32
    %c0_i32_1 = arith.constant 0 : i32
    %5 = arith.cmpi ne, %4, %c0_i32_1 : i32
    scf.if %5 {
      %c0 = arith.constant 0 : index
      %c0_9 = arith.constant 0 : index
      %20 = vector.load %arg1[%c0, %c0_9] : memref<128x256xf32, #tpu.memory_space<vmem>>, vector<128x256xf32>
      %c128_i32 = arith.constant 128 : i32
      %21 = arith.muli %arg0, %c128_i32 : i32
      %22 = tpu.iota {dimensions = array<i32: 0>} : vector<128x1xi32>
      %23 = vector.broadcast %21 : i32 to vector<128x1xi32>
      %24 = arith.addi %23, %22 : vector<128x1xi32>
      %c192_i32 = arith.constant 192 : i32
      %25 = vector.broadcast %c192_i32 : i32 to vector<128x1xi32>
      %26 = arith.cmpi slt, %24, %25 : vector<128x1xi32>
      %cst = arith.constant 0.000000e+00 : f32
      %27 = vector.shape_cast %26 : vector<128x1xi1> to vector<128x1xi1>
      %28 = vector.broadcast %27 : vector<128x1xi1> to vector<128x256xi1>
      %29 = vector.broadcast %cst : f32 to vector<128x256xf32>
      %30 = arith.select %28, %20, %29 : vector<128x256xi1>, vector<128x256xf32>
      %c0_10 = arith.constant 0 : index
      %c0_11 = arith.constant 0 : index
      %31 = vector.load %arg6[%c0_10, %c0_11] : memref<1x256xf32, #tpu.memory_space<vmem>>, vector<1x256xf32>
      %cst_12 = arith.constant dense<0.000000e+00> : vector<256xf32>
      %32 = vector.multi_reduction <add>, %30, %cst_12 [0] : vector<128x256xf32> to vector<256xf32>
      %33 = vector.shape_cast %32 : vector<256xf32> to vector<1x256xf32>
      %34 = arith.addf %31, %33 : vector<1x256xf32>
      %c0_13 = arith.constant 0 : index
      %c0_14 = arith.constant 0 : index
      %35 = vector.load %arg6[%c0_13, %c0_14] : memref<1x256xf32, #tpu.memory_space<vmem>>, vector<1x256xf32>
      tpu.vector_store %arg6[%c0_13, %c0_14], %34 {strides = array<i32>} : memref<1x256xf32, #tpu.memory_space<vmem>>, vector<1x256xf32>,
    } else {
    }
    %c2_i32_2 = arith.constant 2 : i32
    %6 = arith.cmpi eq, %arg0, %c2_i32_2 : i32
    %7 = arith.extui %6 : i1 to i32
    %c0_i32_3 = arith.constant 0 : i32
    %8 = arith.cmpi ne, %7, %c0_i32_3 : i32
    scf.if %8 {
      %c0 = arith.constant 0 : index
      %c0_9 = arith.constant 0 : index
      %20 = vector.load %arg6[%c0, %c0_9] : memref<1x256xf32, #tpu.memory_space<vmem>>, vector<1x256xf32>
      %cst = arith.constant 0.00520833349 : f32
      %21 = vector.broadcast %cst : f32 to vector<1x256xf32>
      %22 = arith.mulf %20, %21 : vector<1x256xf32>
      %23 = arith.negf %22 : vector<1x256xf32>
      %24 = math.exp %23 : vector<1x256xf32>
      %cst_10 = arith.constant 1.000000e+00 : f32
      %25 = vector.broadcast %cst_10 : f32 to vector<1x256xf32>
      %26 = arith.addf %25, %24 : vector<1x256xf32>
      %27 = arith.divf %25, %26 : vector<1x256xf32>
      %c0_11 = arith.constant 0 : index
      %c0_12 = arith.constant 0 : index
      %28 = vector.load %arg3[%c0_11, %c0_12] : memref<256x256xf32, #tpu.memory_space<vmem>>, vector<256x256xf32>
      %29 = tpu.transpose %27, [1, 0] : vector<1x256xf32> -> vector<256x1xf32>
      %cst_13 = arith.constant dense<0.000000e+00> : vector<256x1xf32>
      %30 = tpu.matmul %28, %29, %cst_13 {dimension_numbers = #tpu.dot_dimension_numbers<[1], [0], [0], [1], [0, 0, 1, 1], [], []>} : vector<256x256xf32>, vector<256x1xf32>, vector<256x1xf32> -> vector<256x1xf32>
      %c0_14 = arith.constant 0 : index
      %c0_15 = arith.constant 0 : index
      %31 = vector.load %arg7[%c0_14, %c0_15] : memref<256x1xf32, #tpu.memory_space<vmem>>, vector<256x1xf32>
      tpu.vector_store %arg7[%c0_14, %c0_15], %30 {strides = array<i32>} : memref<256x1xf32, #tpu.memory_space<vmem>>, vector<256x1xf32>,
    } else {
    }
    %c2_i32_4 = arith.constant 2 : i32
    %9 = arith.cmpi sge, %arg0, %c2_i32_4 : i32
    %c4_i32 = arith.constant 4 : i32
    %10 = arith.cmpi slt, %arg0, %c4_i32 : i32
    %11 = arith.andi %9, %10 : i1
    %12 = arith.extui %11 : i1 to i32
    %c0_i32_5 = arith.constant 0 : i32
    %13 = arith.cmpi ne, %12, %c0_i32_5 : i32
    scf.if %13 {
      %c0 = arith.constant 0 : index
      %c0_9 = arith.constant 0 : index
      %20 = vector.load %arg1[%c0, %c0_9] : memref<128x256xf32, #tpu.memory_space<vmem>>, vector<128x256xf32>
      %c2_i32_10 = arith.constant 2 : i32
      %21 = arith.subi %arg0, %c2_i32_10 : i32
      %c128_i32 = arith.constant 128 : i32
      %22 = arith.muli %21, %c128_i32 : i32
      %c0_11 = arith.constant 0 : index
      %c0_12 = arith.constant 0 : index
      %23 = vector.load %arg7[%c0_11, %c0_12] : memref<256x1xf32, #tpu.memory_space<vmem>>, vector<256x1xf32>
      %cst = arith.constant dense<0.000000e+00> : vector<128x1xf32>
      %24 = tpu.matmul %20, %23, %cst {dimension_numbers = #tpu.dot_dimension_numbers<[1], [0], [0], [1], [0, 0, 1, 1], [], []>} : vector<128x256xf32>, vector<256x1xf32>, vector<128x1xf32> -> vector<128x1xf32>
      %c0_13 = arith.constant 0 : index
      %c0_14 = arith.constant 0 : index
      %25 = vector.load %arg4[%c0_13, %c0_14] : memref<1x1xf32, #tpu.memory_space<vmem>>, vector<1x1xf32>
      %26 = vector.broadcast %25 : vector<1x1xf32> to vector<128x1xf32>
      %27 = arith.addf %24, %26 : vector<128x1xf32>
      %cst_15 = arith.constant 0.000000e+00 : f32
      %28 = vector.broadcast %cst_15 : f32 to vector<128x1xf32>
      %29 = arith.subf %28, %27 : vector<128x1xf32>
      %cst_16 = arith.constant 0.000000e+00 : f32
      %30 = vector.broadcast %cst_16 : f32 to vector<128x1xf32>
      %31 = arith.maximumf %29, %30 : vector<128x1xf32>
      %32 = math.absf %29 : vector<128x1xf32>
      %cst_17 = arith.constant 0.000000e+00 : f32
      %33 = vector.broadcast %cst_17 : f32 to vector<128x1xf32>
      %34 = arith.subf %33, %32 : vector<128x1xf32>
      %35 = math.exp %34 : vector<128x1xf32>
      %36 = math.log1p %35 : vector<128x1xf32>
      %37 = arith.addf %31, %36 : vector<128x1xf32>
      %38 = tpu.iota {dimensions = array<i32: 0>} : vector<128x1xi32>
      %39 = vector.broadcast %22 : i32 to vector<128x1xi32>
      %40 = arith.addi %39, %38 : vector<128x1xi32>
      %c192_i32 = arith.constant 192 : i32
      %41 = vector.broadcast %c192_i32 : i32 to vector<128x1xi32>
      %42 = arith.cmpi slt, %40, %41 : vector<128x1xi32>
      %cst_18 = arith.constant 0.000000e+00 : f32
      %43 = vector.broadcast %cst_18 : f32 to vector<128x1xf32>
      %44 = arith.select %42, %37, %43 : vector<128x1xi1>, vector<128x1xf32>
      %c0_19 = arith.constant 0 : index
      %c0_20 = arith.constant 0 : index
      %45 = vector.load %arg8[%c0_19, %c0_20] : memref<1x1xf32, #tpu.memory_space<vmem>>, vector<1x1xf32>
      %46 = vector.shape_cast %44 : vector<128x1xf32> to vector<1x128x1xf32>
      %cst_21 = arith.constant dense<0.000000e+00> : vector<1xf32>
      %47 = vector.multi_reduction <add>, %46, %cst_21 [1, 2] : vector<1x128x1xf32> to vector<1xf32>
      %48 = vector.shape_cast %47 : vector<1xf32> to vector<1x1x1xf32>
      %49 = vector.extract %48[0, 0, 0] : f32 from vector<1x1x1xf32>
      %50 = vector.broadcast %49 : f32 to vector<1x1xf32>
      %51 = arith.addf %45, %50 : vector<1x1xf32>
      %c0_22 = arith.constant 0 : index
      %c0_23 = arith.constant 0 : index
      %52 = vector.load %arg8[%c0_22, %c0_23] : memref<1x1xf32, #tpu.memory_space<vmem>>, vector<1x1xf32>
      tpu.vector_store %arg8[%c0_22, %c0_23], %51 {strides = array<i32>} : memref<1x1xf32, #tpu.memory_space<vmem>>, vector<1x1xf32>,
    } else {
    }
    %c4_i32_6 = arith.constant 4 : i32
    %14 = arith.cmpi sge, %arg0, %c4_i32_6 : i32
    %15 = arith.extui %14 : i1 to i32
    %c0_i32_7 = arith.constant 0 : i32
    %16 = arith.cmpi ne, %15, %c0_i32_7 : i32
    scf.if %16 {
      %c0 = arith.constant 0 : index
      %c0_9 = arith.constant 0 : index
      %20 = vector.load %arg2[%c0, %c0_9] : memref<128x256xf32, #tpu.memory_space<vmem>>, vector<128x256xf32>
      %c4_i32_10 = arith.constant 4 : i32
      %21 = arith.subi %arg0, %c4_i32_10 : i32
      %c128_i32 = arith.constant 128 : i32
      %22 = arith.muli %21, %c128_i32 : i32
      %c0_11 = arith.constant 0 : index
      %c0_12 = arith.constant 0 : index
      %23 = vector.load %arg7[%c0_11, %c0_12] : memref<256x1xf32, #tpu.memory_space<vmem>>, vector<256x1xf32>
      %cst = arith.constant dense<0.000000e+00> : vector<128x1xf32>
      %24 = tpu.matmul %20, %23, %cst {dimension_numbers = #tpu.dot_dimension_numbers<[1], [0], [0], [1], [0, 0, 1, 1], [], []>} : vector<128x256xf32>, vector<256x1xf32>, vector<128x1xf32> -> vector<128x1xf32>
      %c0_13 = arith.constant 0 : index
      %c0_14 = arith.constant 0 : index
      %25 = vector.load %arg4[%c0_13, %c0_14] : memref<1x1xf32, #tpu.memory_space<vmem>>, vector<1x1xf32>
      %26 = vector.broadcast %25 : vector<1x1xf32> to vector<128x1xf32>
      %27 = arith.addf %24, %26 : vector<128x1xf32>
      %cst_15 = arith.constant 0.000000e+00 : f32
      %28 = vector.broadcast %cst_15 : f32 to vector<128x1xf32>
      %29 = arith.maximumf %27, %28 : vector<128x1xf32>
      %30 = math.absf %27 : vector<128x1xf32>
      %cst_16 = arith.constant 0.000000e+00 : f32
      %31 = vector.broadcast %cst_16 : f32 to vector<128x1xf32>
      %32 = arith.subf %31, %30 : vector<128x1xf32>
      %33 = math.exp %32 : vector<128x1xf32>
      %34 = math.log1p %33 : vector<128x1xf32>
      %35 = arith.addf %29, %34 : vector<128x1xf32>
      %36 = tpu.iota {dimensions = array<i32: 0>} : vector<128x1xi32>
      %37 = vector.broadcast %22 : i32 to vector<128x1xi32>
      %38 = arith.addi %37, %36 : vector<128x1xi32>
      %c320_i32 = arith.constant 320 : i32
      %39 = vector.broadcast %c320_i32 : i32 to vector<128x1xi32>
      %40 = arith.cmpi slt, %38, %39 : vector<128x1xi32>
      %cst_17 = arith.constant 0.000000e+00 : f32
      %41 = vector.broadcast %cst_17 : f32 to vector<128x1xf32>
      %42 = arith.select %40, %35, %41 : vector<128x1xi1>, vector<128x1xf32>
      %c0_18 = arith.constant 0 : index
      %c0_19 = arith.constant 0 : index
      %43 = vector.load %arg8[%c0_18, %c0_19] : memref<1x1xf32, #tpu.memory_space<vmem>>, vector<1x1xf32>
      %44 = vector.shape_cast %42 : vector<128x1xf32> to vector<1x128x1xf32>
      %cst_20 = arith.constant dense<0.000000e+00> : vector<1xf32>
      %45 = vector.multi_reduction <add>, %44, %cst_20 [1, 2] : vector<1x128x1xf32> to vector<1xf32>
      %46 = vector.shape_cast %45 : vector<1xf32> to vector<1x1x1xf32>
      %47 = vector.extract %46[0, 0, 0] : f32 from vector<1x1x1xf32>
      %48 = vector.broadcast %47 : f32 to vector<1x1xf32>
      %49 = arith.addf %43, %48 : vector<1x1xf32>
      %c0_21 = arith.constant 0 : index
      %c0_22 = arith.constant 0 : index
      %50 = vector.load %arg8[%c0_21, %c0_22] : memref<1x1xf32, #tpu.memory_space<vmem>>, vector<1x1xf32>
      tpu.vector_store %arg8[%c0_21, %c0_22], %49 {strides = array<i32>} : memref<1x1xf32, #tpu.memory_space<vmem>>, vector<1x1xf32>,
    } else {
    }
    %c6_i32 = arith.constant 6 : i32
    %17 = arith.cmpi eq, %arg0, %c6_i32 : i32
    %18 = arith.extui %17 : i1 to i32
    %c0_i32_8 = arith.constant 0 : i32
    %19 = arith.cmpi ne, %18, %c0_i32_8 : i32
    scf.if %19 {
      %c0 = arith.constant 0 : index
      %c0_9 = arith.constant 0 : index
      %20 = vector.load %arg8[%c0, %c0_9] : memref<1x1xf32, #tpu.memory_space<vmem>>, vector<1x1xf32>
      %cst = arith.constant 0.001953125 : f32
      %21 = vector.broadcast %cst : f32 to vector<1x1xf32>
      %22 = arith.mulf %20, %21 : vector<1x1xf32>
      %c0_10 = arith.constant 0 : index
      %c0_11 = arith.constant 0 : index
      %23 = vector.load %arg5[%c0_10, %c0_11] : memref<1x1xf32, #tpu.memory_space<vmem>>, vector<1x1xf32>
      tpu.vector_store %arg5[%c0_10, %c0_11], %22 {strides = array<i32>} : memref<1x1xf32, #tpu.memory_space<vmem>>, vector<1x1xf32>,
    } else {
    }
    return
  }
  func.func @transform_0(%arg0: i32) -> (i32, i32) {
    %c2_i32 = arith.constant 2 : i32
    %0 = arith.cmpi slt, %arg0, %c2_i32 : i32
    %c2_i32_0 = arith.constant 2 : i32
    %1 = arith.subi %arg0, %c2_i32_0 : i32
    %2 = arith.select %0, %arg0, %1 : i32
    %c4_i32 = arith.constant 4 : i32
    %3 = arith.cmpi slt, %arg0, %c4_i32 : i32
    %c1_i32 = arith.constant 1 : i32
    %4 = arith.select %3, %2, %c1_i32 : i32
    %c0_i32 = arith.constant 0 : i32
    %c0_i32_1 = arith.constant 0 : i32
    return %4, %c0_i32 : i32, i32
  }
  func.func @transform_1(%arg0: i32) -> (i32, i32) {
    %c4_i32 = arith.constant 4 : i32
    %0 = arith.subi %arg0, %c4_i32 : i32
    %c0_i32 = arith.constant 0 : i32
    %1 = arith.maxsi %0, %c0_i32 : i32
    %c0_i32_0 = arith.constant 0 : i32
    %c0_i32_1 = arith.constant 0 : i32
    return %1, %c0_i32_0 : i32, i32
  }
  func.func @transform_2(%arg0: i32) -> (i32, i32) {
    %c0_i32 = arith.constant 0 : i32
    %c0_i32_0 = arith.constant 0 : i32
    %c0_i32_1 = arith.constant 0 : i32
    return %c0_i32, %c0_i32_0 : i32, i32
  }
  func.func @transform_3(%arg0: i32) -> (i32, i32) {
    %c0_i32 = arith.constant 0 : i32
    %c0_i32_0 = arith.constant 0 : i32
    %c0_i32_1 = arith.constant 0 : i32
    return %c0_i32, %c0_i32_0 : i32, i32
  }
  func.func @transform_4(%arg0: i32) -> (i32, i32) {
    %c0_i32 = arith.constant 0 : i32
    %c0_i32_0 = arith.constant 0 : i32
    %c0_i32_1 = arith.constant 0 : i32
    return %c0_i32, %c0_i32_0 : i32, i32
  }
}

</mosaic_0001>

<llo_original>
// kernel: tpu_custom_call.1
$region0: #{tpu_custom_call.1}
  #allocation0 [shape = 'u32[]', space=smem, size = 0x4, offset = 0x4, fixed_abs, tag = 'smem constant byte address 0x4 - core index']
  #allocation1 [shape = 'u32[144,128]{1,0:T(1,128)}', space=vmem, size = 0x12000, scoped, tag = 'internal scratch']
  #allocation2 [shape = 'f32[1,256]{1,0:T(1,128)}', space=vmem, size = 0x400, scoped, tag = 'scratch operand']
  #allocation3 [shape = 'f32[256,1]{1,0:T(8,128)}', space=vmem, size = 0x20000, scoped, tag = 'scratch operand']
  #allocation4 [shape = 'f32[1,1]{1,0:T(1,128)}', space=vmem, size = 0x200, scoped, tag = 'scratch operand']
  #allocation5 [shape = 'f32[1,1]{1,0:T(1,128)S(1)}', space=vmem, size = 0x200, scoped, tag = 'scoped memory for tpu_custom_call.1']
  %s0 = inlined_call_operand.hbm [shape: f32[192,256], index: 0, kind: input, shape index: {}]
  %s1 = inlined_call_operand.hbm [shape: f32[320,256], index: 1, kind: input, shape index: {}]
  %s2 = inlined_call_operand.hbm [shape: f32[256,256], index: 2, kind: input, shape index: {}]
  %s3 = inlined_call_operand.<no memory space> [shape: f32[1,1], index: 3, kind: input, shape index: {}]
  %s4 = inlined_call_operand.hbm [shape: f32[1,1], index: 4, kind: output, shape index: {}]
  %s5 = sld [smem:[#allocation0]]
  $region85: #{tpu_custom_call.1} parent=0
    _
  %s7 = ssub.s32 1, %s5
  %s8 = scalar_select 0, %s7, %s5
  %v9 = vstv %s3
  %10 = vst [vmem:[#allocation5] sm:$0x1] %v9
  $region1: #{tpu_custom_call.1} parent=0
    #allocation6 [shape = 'u8[262144]{0}', space=vmem, size = 0x40000, scoped, tag = 'input window, operand 0']
    #allocation7 [shape = 's32[2]{0}', space=sflag, size = 0x8, scoped, tag = 'scoped memory for tpu_custom_call.1']
    #allocation8 [shape = 's32[2]{0}', space=sflag, size = 0x8, scoped, tag = 'scoped memory for tpu_custom_call.1']
    #allocation9 [shape = 'u8[262144]{0}', space=vmem, size = 0x40000, scoped, tag = 'input window, operand 1']
    #allocation10 [shape = 's32[2]{0}', space=sflag, size = 0x8, scoped, tag = 'scoped memory for tpu_custom_call.1']
    #allocation11 [shape = 'u8[262144]{0}', space=vmem, size = 0x40000, scoped, tag = 'input window, operand 2, single buffered']
    #allocation12 [shape = 'u8[512]{0}', space=vmem, size = 0x400, scoped, tag = 'output window, operand 0, single buffered']
    %11 = vsyncpa [#allocation7], 0
    %s12 = scalar_lea.sflag [#allocation7], 1
    %13 = vsyncpa %s12, 0
    %14 = vsyncpa [#allocation10], 0
    %s15 = scalar_lea.sflag [#allocation10], 1
    %16 = vsyncpa %s15, 0
    %17 = vsyncpa [#allocation8], 0
    loop: start=0, step=1, limit=9
    $region2: #{tpu_custom_call.1} parent=1 // loop_pre_header
      _
    $region3: #{tpu_custom_call.1} parent=1 // loop_header
      %s19 = sphi 0, %s23
      %p20 = scmp.ge.s32.totalorder %s19, 9
      %s39 = sphi 0, %s41
      %s42 = sphi 0, %s39
      %s43 = sphi 0, %s42
      %s59 = sphi 0, %s43
      %s71 = sphi 0, %s73
      %s74 = sphi 0, %s71
      %s75 = sphi 0, %s74
      %s91 = sphi 0, %s75
      %s95 = sphi 0, %s95
      %s97 = sphi 0, %s95
      %s98 = sphi 0, %s97
      %s112 = sphi 0, %s98
      %s116 = sphi 0, %s116
      %s118 = sphi 0, %s116
      %s119 = sphi 0, %s118
      %s133 = sphi 0, %s119
      %s137 = sphi 0, %s137
      %s139 = sphi 0, %s137
      %s140 = sphi 0, %s139
      %s154 = sphi 0, %s140
    $region4: #{tpu_custom_call.1} parent=1 // loop_header_branch
      %22 = sbr.rel (%p20) target = $region8
    $region5: #{tpu_custom_call.1} parent=1 // loop_body
      %s24 = ssub.s32 %s19, 1
      %s25 = ssub.s32 %s19, 2
      %s26 = sadd.s32 %s19, 1
      %p27 = scmp.lt.s32.totalorder %s19, 2
      %s28 = ssub.s32 %s19, 2
      %s29 = scalar_select %p27, %s19, %s28
      %p30 = scmp.lt.s32.totalorder %s19, 4
      %s31 = scalar_select %p30, %s29, 1
      %p32 = scmp.lt.s32.totalorder %s26, 2
      %s33 = ssub.s32 %s26, 2
      %s34 = scalar_select %p32, %s26, %s33
      %p35 = scmp.lt.s32.totalorder %s26, 4
      %s36 = scalar_select %p35, %s34, 1
      %s37 = ssub.s32 %s31, %s36
      %p38 = scmp.eq.s32.totalorder %s37, 0
      %s40 = sadd.s32 %s39, 1
      %s41 = scalar_select %p38, %s39, %s40
      %p44 = pneg %p38
      %p45 = scmp.eq.s32.totalorder %s19, 6
      %p46 = por %p44, %p45
      %p47 = scmp.ne.s32.totalorder %s39, %s42
      %p48 = scmp.eq.s32.totalorder %s19, 0
      %p49 = por %p47, %p48
      %p50 = scmp.ne.s32.totalorder %s39, %s42
      %p51 = scmp.eq.s32.totalorder %s24, 6
      %p52 = por %p50, %p51
      %p53 = scmp.ne.s32.totalorder %s42, %s43
      %p54 = scmp.eq.s32.totalorder %s24, 0
      %p55 = por %p53, %p54
      %p56 = scmp.ne.s32.totalorder %s42, %s43
      %p57 = scmp.eq.s32.totalorder %s25, 6
      %p58 = por %p56, %p57
      %p60 = scmp.ne.s32.totalorder %s43, %s59
      %p61 = scmp.eq.s32.totalorder %s25, 0
      %p62 = por %p60, %p61
      %s63 = ssub.s32 %s19, 4
      %p64 = scmp.gt.s32.totalorder %s63, 0
      %s65 = scalar_select %p64, %s63, 0
      %s66 = ssub.s32 %s26, 4
      %p67 = scmp.gt.s32.totalorder %s66, 0
      %s68 = scalar_select %p67, %s66, 0
      %s69 = ssub.s32 %s65, %s68
      %p70 = scmp.eq.s32.totalorder %s69, 0
      %s72 = sadd.s32 %s71, 1
      %s73 = scalar_select %p70, %s71, %s72
      %p76 = pneg %p70
      %p77 = scmp.eq.s32.totalorder %s19, 6
      %p78 = por %p76, %p77
      %p79 = scmp.ne.s32.totalorder %s71, %s74
      %p80 = scmp.eq.s32.totalorder %s19, 0
      %p81 = por %p79, %p80
      %p82 = scmp.ne.s32.totalorder %s71, %s74
      %p83 = scmp.eq.s32.totalorder %s24, 6
      %p84 = por %p82, %p83
      %p85 = scmp.ne.s32.totalorder %s74, %s75
      %p86 = scmp.eq.s32.totalorder %s24, 0
      %p87 = por %p85, %p86
      %p88 = scmp.ne.s32.totalorder %s74, %s75
      %p89 = scmp.eq.s32.totalorder %s25, 6
      %p90 = por %p88, %p89
      %p92 = scmp.ne.s32.totalorder %s75, %s91
      %p93 = scmp.eq.s32.totalorder %s25, 0
      %p94 = por %p92, %p93
      %s96 = sadd.s32 %s95, 1
      %p99 = scmp.eq.s32.totalorder %s19, 6
      %p100 = scmp.ne.s32.totalorder %s95, %s97
      %p101 = scmp.eq.s32.totalorder %s19, 0
      %p102 = por %p100, %p101
      %p103 = scmp.ne.s32.totalorder %s95, %s97
      %p104 = scmp.eq.s32.totalorder %s24, 6
      %p105 = por %p103, %p104
      %p106 = scmp.ne.s32.totalorder %s97, %s98
      %p107 = scmp.eq.s32.totalorder %s24, 0
      %p108 = por %p106, %p107
      %p109 = scmp.ne.s32.totalorder %s97, %s98
      %p110 = scmp.eq.s32.totalorder %s25, 6
      %p111 = por %p109, %p110
      %p113 = scmp.ne.s32.totalorder %s98, %s112
      %p114 = scmp.eq.s32.totalorder %s25, 0
      %p115 = por %p113, %p114
      %s117 = sadd.s32 %s116, 1
      %p120 = scmp.eq.s32.totalorder %s19, 6
      %p121 = scmp.ne.s32.totalorder %s116, %s118
      %p122 = scmp.eq.s32.totalorder %s19, 0
      %p123 = por %p121, %p122
      %p124 = scmp.ne.s32.totalorder %s116, %s118
      %p125 = scmp.eq.s32.totalorder %s24, 6
      %p126 = por %p124, %p125
      %p127 = scmp.ne.s32.totalorder %s118, %s119
      %p128 = scmp.eq.s32.totalorder %s24, 0
      %p129 = por %p127, %p128
      %p130 = scmp.ne.s32.totalorder %s118, %s119
      %p131 = scmp.eq.s32.totalorder %s25, 6
      %p132 = por %p130, %p131
      %p134 = scmp.ne.s32.totalorder %s119, %s133
      %p135 = scmp.eq.s32.totalorder %s25, 0
      %p136 = por %p134, %p135
      %s138 = sadd.s32 %s137, 1
      %p141 = scmp.eq.s32.totalorder %s19, 6
      %p142 = scmp.ne.s32.totalorder %s137, %s139
      %p143 = scmp.eq.s32.totalorder %s19, 0
      %p144 = por %p142, %p143
      %p145 = scmp.ne.s32.totalorder %s137, %s139
      %p146 = scmp.eq.s32.totalorder %s24, 6
      %p147 = por %p145, %p146
      %p148 = scmp.ne.s32.totalorder %s139, %s140
      %p149 = scmp.eq.s32.totalorder %s24, 0
      %p150 = por %p148, %p149
      %p151 = scmp.ne.s32.totalorder %s139, %s140
      %p152 = scmp.eq.s32.totalorder %s25, 6
      %p153 = por %p151, %p152
      %p155 = scmp.ne.s32.totalorder %s140, %s154
      %p156 = scmp.eq.s32.totalorder %s25, 0
      %p157 = por %p155, %p156
      %p158 = scmp.le.s32.totalorder 1, %s19
      %p159 = scmp.lt.s32.totalorder %s19, 8
      %p160 = pnand %p158, %p159
      %p161 = pneg %p160
      // Predicated region
      $region9: #{tpu_custom_call.1} parent=5 // pred_check
        _
      $region10: #{tpu_custom_call.1} parent=5 // pred_check_branch
        %163 = sbr.rel (%p160) target = $region12
      $region11: #{tpu_custom_call.1} parent=5 // pred_region
        %s164 = ssub.s32 %s19, 1
        // Predicated region
        $region13: #{tpu_custom_call.1} parent=11 // pred_check
          %p165 = pneg %p108
        $region14: #{tpu_custom_call.1} parent=11 // pred_check_branch
          %167 = sbr.rel (%p165) target = $region16
        $region15: #{tpu_custom_call.1} parent=11 // pred_region
          %s169 = ssub.s32 8192, 8192
          %170 = vsyncadd [#allocation10], %s169
          %s171 = sshll.u32 [#allocation11], 4
          %s172 = int_to_ptr.vmem [resolvable:$true] %s171
          %177 = dma.hbm_to_vmem [thread:$0]  %s2, 8192, %s172, [#allocation10], 256, 256, 16
        $region16: #{tpu_custom_call.1} parent=11 // pred_fallthru
          _
        // Predicated region
        $region17: #{tpu_custom_call.1} parent=11 // pred_check
          %p178 = pneg %p129
        $region18: #{tpu_custom_call.1} parent=11 // pred_check_branch
          %180 = sbr.rel (%p178) target = $region20
        $region19: #{tpu_custom_call.1} parent=11 // pred_region
          _
        $region20: #{tpu_custom_call.1} parent=11 // pred_fallthru
          _
      $region12: #{tpu_custom_call.1} parent=5 // pred_fallthru
        _
      %p181 = scmp.lt.s32.totalorder %s19, 7
      // Predicated region
      $region21: #{tpu_custom_call.1} parent=5 // pred_check
        %p182 = pneg %p181
      $region22: #{tpu_custom_call.1} parent=5 // pred_check_branch
        %184 = sbr.rel (%p182) target = $region24
      $region23: #{tpu_custom_call.1} parent=5 // pred_region
        // Predicated region
        $region25: #{tpu_custom_call.1} parent=23 // pred_check
          %p185 = pneg %p49
        $region26: #{tpu_custom_call.1} parent=23 // pred_check_branch
          %187 = sbr.rel (%p185) target = $region28
        $region27: #{tpu_custom_call.1} parent=23 // pred_region
          %s188 = sand.u32 %s39, 1
          %s189 = scalar_lea.sflag [#allocation7], %s188
          %s190 = sand.u32 %s39, 1
          %s191 = smul.addr %s190, 256
          %s192 = scalar_lea.vmem [#allocation6], %s191
          %p193 = scmp.lt.s32.totalorder %s19, 2
          %s194 = ssub.s32 %s19, 2
          %s195 = scalar_select %p193, %s19, %s194
          %p196 = scmp.lt.s32.totalorder %s19, 4
          %s197 = scalar_select %p196, %s195, 1
          %s198 = smul.u32 16, %s197
          %s199 = ssub.s32 24, %s198
          %p200 = scmp.lt.s32.totalorder %s199, 16
          %s201 = scalar_select %p200, %s199, 16
          %s202 = smul.u32 128, %s201
          %s203 = smul.u32 %s202, 2
          %s205 = ssub.s32 4096, %s203
          %206 = vsyncadd %s189, %s205
          %p207 = scmp.ne.s32.totalorder 0, %s203
          %s208 = smul.addr %s198, 2
          %s209 = smul.addr %s208, 128
          %s210 = scalar_lea.hbm %s0, %s209
          %s211 = smul.u32 16, %s201
          %s212 = sshll.u32 %s192, 4
          %s213 = int_to_ptr.vmem [resolvable:$true] %s212
          %s214 = sshll.u32 %s211, 4
          %218 = dma.hbm_to_vmem [thread:$0]  (%p207), %s210, %s214, %s213, %s189, 256, 256, 16
        $region28: #{tpu_custom_call.1} parent=23 // pred_fallthru
          _
        // Predicated region
        $region29: #{tpu_custom_call.1} parent=23 // pred_check
          %p219 = pneg %p81
        $region30: #{tpu_custom_call.1} parent=23 // pred_check_branch
          %221 = sbr.rel (%p219) target = $region32
        $region31: #{tpu_custom_call.1} parent=23 // pred_region
          %s222 = sand.u32 %s19, 1
          %s223 = scalar_lea.sflag [#allocation10], %s222
          %s224 = sand.u32 %s71, 1
          %s225 = smul.addr %s224, 256
          %s226 = scalar_lea.vmem [#allocation9], %s225
          %s227 = ssub.s32 %s19, 4
          %p228 = scmp.gt.s32.totalorder %s227, 0
          %s229 = scalar_select %p228, %s227, 0
          %s230 = smul.u32 16, %s229
          %s231 = ssub.s32 40, %s230
          %p232 = scmp.lt.s32.totalorder %s231, 16
          %s233 = scalar_select %p232, %s231, 16
          %s234 = smul.u32 128, %s233
          %s235 = smul.u32 %s234, 2
          %s237 = ssub.s32 4096, %s235
          %238 = vsyncadd %s223, %s237
          %p239 = scmp.ne.s32.totalorder 0, %s235
          %s240 = smul.addr %s230, 2
          %s241 = smul.addr %s240, 128
          %s242 = scalar_lea.hbm %s1, %s241
          %s243 = smul.u32 16, %s233
          %s244 = sshll.u32 %s226, 4
          %s245 = int_to_ptr.vmem [resolvable:$true] %s244
          %s246 = sshll.u32 %s243, 4
          %250 = dma.hbm_to_vmem [thread:$0]  (%p239), %s242, %s246, %s245, %s223, 256, 256, 16
        $region32: #{tpu_custom_call.1} parent=23 // pred_fallthru
          _
      $region24: #{tpu_custom_call.1} parent=5 // pred_fallthru
        _
      %p251 = scmp.le.s32.totalorder 1, %s19
      %p252 = scmp.lt.s32.totalorder %s19, 8
      %p253 = pnand %p251, %p252
      %p254 = pneg %p253
      // Predicated region
      $region33: #{tpu_custom_call.1} parent=5 // pred_check
        _
      $region34: #{tpu_custom_call.1} parent=5 // pred_check_branch
        %256 = sbr.rel (%p253) target = $region36
      $region35: #{tpu_custom_call.1} parent=5 // pred_region
        %s257 = ssub.s32 %s19, 1
        %s258 = sand.u32 %s42, 1
        %s259 = scalar_lea.sflag [#allocation7], %s258
        %s260 = sand.u32 %s42, 1
        %s261 = smul.addr %s260, 256
        %s262 = scalar_lea.vmem [#allocation6], %s261
        // Predicated region
        $region37: #{tpu_custom_call.1} parent=35 // pred_check
          %p263 = pneg %p55
        $region38: #{tpu_custom_call.1} parent=35 // pred_check_branch
          %265 = sbr.rel (%p263) target = $region40
        $region39: #{tpu_custom_call.1} parent=35 // pred_region
          %266 = dma.done %s259, 4096
        $region40: #{tpu_custom_call.1} parent=35 // pred_fallthru
          _
        %s267 = sand.u32 %s24, 1
        %s268 = scalar_lea.sflag [#allocation10], %s267
        %s269 = sand.u32 %s74, 1
        %s270 = smul.addr %s269, 256
        %s271 = scalar_lea.vmem [#allocation9], %s270
        // Predicated region
        $region41: #{tpu_custom_call.1} parent=35 // pred_check
          %p272 = pneg %p87
        $region42: #{tpu_custom_call.1} parent=35 // pred_check_branch
          %274 = sbr.rel (%p272) target = $region44
        $region43: #{tpu_custom_call.1} parent=35 // pred_region
          %275 = dma.done %s268, 4096
        $region44: #{tpu_custom_call.1} parent=35 // pred_fallthru
          _
        // Predicated region
        $region45: #{tpu_custom_call.1} parent=35 // pred_check
          %p276 = pneg %p108
        $region46: #{tpu_custom_call.1} parent=35 // pred_check_branch
          %278 = sbr.rel (%p276) target = $region48
        $region47: #{tpu_custom_call.1} parent=35 // pred_region
          %279 = dma.done [#allocation10], 8192
        $region48: #{tpu_custom_call.1} parent=35 // pred_fallthru
          _
        %s280 = sand.u32 %s42, 1
        %s281 = scalar_lea.sflag [#allocation7], %s280
        %s282 = sand.u32 %s42, 1
        %s283 = smul.addr %s282, 256
        %s284 = scalar_lea.vmem [#allocation6], %s283
        %p285 = pneg %p55
        %p286 = pneg %p52
        %s287 = sand.u32 %s24, 1
        %s288 = scalar_lea.sflag [#allocation10], %s287
        %s289 = sand.u32 %s74, 1
        %s290 = smul.addr %s289, 256
        %s291 = scalar_lea.vmem [#allocation9], %s290
        %p292 = pneg %p87
        %p293 = pneg %p84
        %p294 = pneg %p108
        %p295 = pneg %p105
        %p296 = pneg %p129
        %p297 = pneg %p126
        %p298 = pneg %p150
        %p299 = pneg %p147
        %p300 = scmp.lt.s32.totalorder %s24, 2
        %s301 = ssub.s32 %s24, 2
        %s302 = scalar_select %p300, %s24, %s301
        %p303 = scmp.lt.s32.totalorder %s24, 4
        %s304 = scalar_select %p303, %s302, 1
        %s305 = smul.u32 16, %s304
        %s306 = ssub.s32 24, %s305
        %p307 = scmp.lt.s32.totalorder %s306, 16
        %s308 = scalar_select %p307, %s306, 16
        %s309 = smul.u32 128, %s308
        %s310 = smul.u32 %s309, 2
        %s311 = ssub.s32 %s24, 4
        %p312 = scmp.gt.s32.totalorder %s311, 0
        %s313 = scalar_select %p312, %s311, 0
        %s314 = smul.u32 16, %s313
        %s315 = ssub.s32 40, %s314
        %p316 = scmp.lt.s32.totalorder %s315, 16
        %s317 = scalar_select %p316, %s315, 16
        %s318 = smul.u32 128, %s317
        %s319 = smul.u32 %s318, 2
        %p320 = scmp.eq.s32.totalorder %s24, 0
        // Predicated region
        $region49: #{tpu_custom_call.1} parent=35 // pred_check
          %p321 = pneg %p320
        $region50: #{tpu_custom_call.1} parent=35 // pred_check_branch
          %323 = sbr.rel (%p321) target = $region52
        $region51: #{tpu_custom_call.1} parent=35 // pred_region
          %v324 = vlaneseq
          %vm325 = vcmp.ge.s32.totalorder %v324, 0
          %vm326 = vcmp.lt.s32.totalorder %v324, 256
          %vm327 = vmand %vm325, %vm326
          %328 = vst.msk [vmem:[#allocation2] sm:$0x3] %vm327, 0.0
          %vm329 = vcmask 0
          %330 = vst.msk [vmem:[#allocation4] sm:$0x1] %vm329, 0.0
        $region52: #{tpu_custom_call.1} parent=35 // pred_fallthru
          _
        %p331 = scmp.lt.s32.totalorder %s24, 2
        // Predicated region
        $region53: #{tpu_custom_call.1} parent=35 // pred_check
          %p332 = pneg %p331
        $region54: #{tpu_custom_call.1} parent=35 // pred_check_branch
          %334 = sbr.rel (%p332) target = $region56
        $region55: #{tpu_custom_call.1} parent=35 // pred_region
          %v335 = vld [vmem:[%s262] sm:$0xff]
          %v336 = vld [vmem:[%s262 + $0x8] sm:$0xff]
          %v337 = vld [vmem:[%s262 + $0x10] sm:$0xff]
          %v338 = vld [vmem:[%s262 + $0x18] sm:$0xff]
          %v339 = vld [vmem:[%s262 + $0x20] sm:$0xff]
          %v340 = vld [vmem:[%s262 + $0x28] sm:$0xff]
          %v341 = vld [vmem:[%s262 + $0x30] sm:$0xff]
          %v342 = vld [vmem:[%s262 + $0x38] sm:$0xff]
          %v343 = vld [vmem:[%s262 + $0x40] sm:$0xff]
          %v344 = vld [vmem:[%s262 + $0x48] sm:$0xff]
          %v345 = vld [vmem:[%s262 + $0x50] sm:$0xff]
          %v346 = vld [vmem:[%s262 + $0x58] sm:$0xff]
          %v347 = vld [vmem:[%s262 + $0x60] sm:$0xff]
          %v348 = vld [vmem:[%s262 + $0x68] sm:$0xff]
          %v349 = vld [vmem:[%s262 + $0x70] sm:$0xff]
          %v350 = vld [vmem:[%s262 + $0x78] sm:$0xff]
          %v351 = vld [vmem:[%s262 + $0x80] sm:$0xff]
          %v352 = vld [vmem:[%s262 + $0x88] sm:$0xff]
          %v353 = vld [vmem:[%s262 + $0x90] sm:$0xff]
          %v354 = vld [vmem:[%s262 + $0x98] sm:$0xff]
          %v355 = vld [vmem:[%s262 + $0xa0] sm:$0xff]
          %v356 = vld [vmem:[%s262 + $0xa8] sm:$0xff]
          %v357 = vld [vmem:[%s262 + $0xb0] sm:$0xff]
          %v358 = vld [vmem:[%s262 + $0xb8] sm:$0xff]
          %v359 = vld [vmem:[%s262 + $0xc0] sm:$0xff]
          %v360 = vld [vmem:[%s262 + $0xc8] sm:$0xff]
          %v361 = vld [vmem:[%s262 + $0xd0] sm:$0xff]
          %v362 = vld [vmem:[%s262 + $0xd8] sm:$0xff]
          %v363 = vld [vmem:[%s262 + $0xe0] sm:$0xff]
          %v364 = vld [vmem:[%s262 + $0xe8] sm:$0xff]
          %v365 = vld [vmem:[%s262 + $0xf0] sm:$0xff]
          %v366 = vld [vmem:[%s262 + $0xf8] sm:$0xff]
          %s367 = smul.u32 %s24, 128
          %v368 = vlaneseq
          %v369 = vshrl.u32 %v368, 7
          %v370 = vadd.s32 %v369, 8
          %v371 = vadd.s32 %v369, 16
          %v372 = vadd.s32 %v369, 24
          %v373 = vadd.s32 %v369, 32
          %v374 = vadd.s32 %v369, 40
          %v375 = vadd.s32 %v369, 48
          %v376 = vadd.s32 %v369, 56
          %v377 = vadd.s32 %v369, 64
          %v378 = vadd.s32 %v369, 72
          %v379 = vadd.s32 %v369, 80
          %v380 = vadd.s32 %v369, 88
          %v381 = vadd.s32 %v369, 96
          %v382 = vadd.s32 %v369, 104
          %v383 = vadd.s32 %v369, 112
          %v384 = vadd.s32 %v369, 120
          %v385 = vstv %s367
          %v386 = vadd.s32 %v385, %v369
          %v387 = vadd.s32 %v385, %v370
          %v388 = vadd.s32 %v385, %v371
          %v389 = vadd.s32 %v385, %v372
          %v390 = vadd.s32 %v385, %v373
          %v391 = vadd.s32 %v385, %v374
          %v392 = vadd.s32 %v385, %v375
          %v393 = vadd.s32 %v385, %v376
          %v394 = vadd.s32 %v385, %v377
          %v395 = vadd.s32 %v385, %v378
          %v396 = vadd.s32 %v385, %v379
          %v397 = vadd.s32 %v385, %v380
          %v398 = vadd.s32 %v385, %v381
          %v399 = vadd.s32 %v385, %v382
          %v400 = vadd.s32 %v385, %v383
          %v401 = vadd.s32 %v385, %v384
          %vm402 = vcmp.lt.s32.totalorder %v386, 192
          %vm403 = vcmp.lt.s32.totalorder %v387, 192
          %vm404 = vcmp.lt.s32.totalorder %v388, 192
          %vm405 = vcmp.lt.s32.totalorder %v389, 192
          %vm406 = vcmp.lt.s32.totalorder %v390, 192
          %vm407 = vcmp.lt.s32.totalorder %v391, 192
          %vm408 = vcmp.lt.s32.totalorder %v392, 192
          %vm409 = vcmp.lt.s32.totalorder %v393, 192
          %vm410 = vcmp.lt.s32.totalorder %v394, 192
          %vm411 = vcmp.lt.s32.totalorder %v395, 192
          %vm412 = vcmp.lt.s32.totalorder %v396, 192
          %vm413 = vcmp.lt.s32.totalorder %v397, 192
          %vm414 = vcmp.lt.s32.totalorder %v398, 192
          %vm415 = vcmp.lt.s32.totalorder %v399, 192
          %vm416 = vcmp.lt.s32.totalorder %v400, 192
          %vm417 = vcmp.lt.s32.totalorder %v401, 192
          %v418 = vsel %vm402, 1, 0
          %v419 = vsel %vm403, 1, 0
          %v420 = vsel %vm404, 1, 0
          %v421 = vsel %vm405, 1, 0
          %v422 = vsel %vm406, 1, 0
          %v423 = vsel %vm407, 1, 0
          %v424 = vsel %vm408, 1, 0
          %v425 = vsel %vm409, 1, 0
          %v426 = vsel %vm410, 1, 0
          %v427 = vsel %vm411, 1, 0
          %v428 = vsel %vm412, 1, 0
          %v429 = vsel %vm413, 1, 0
          %v430 = vsel %vm414, 1, 0
          %v431 = vsel %vm415, 1, 0
          %v432 = vsel %vm416, 1, 0
          %v433 = vsel %vm417, 1, 0
          %vm434 = vcmp.eq.s32.totalorder %v418, 1
          %vm435 = vcmp.eq.s32.totalorder %v419, 1
          %vm436 = vcmp.eq.s32.totalorder %v420, 1
          %vm437 = vcmp.eq.s32.totalorder %v421, 1
          %vm438 = vcmp.eq.s32.totalorder %v422, 1
          %vm439 = vcmp.eq.s32.totalorder %v423, 1
          %vm440 = vcmp.eq.s32.totalorder %v424, 1
          %vm441 = vcmp.eq.s32.totalorder %v425, 1
          %vm442 = vcmp.eq.s32.totalorder %v426, 1
          %vm443 = vcmp.eq.s32.totalorder %v427, 1
          %vm444 = vcmp.eq.s32.totalorder %v428, 1
          %vm445 = vcmp.eq.s32.totalorder %v429, 1
          %vm446 = vcmp.eq.s32.totalorder %v430, 1
          %vm447 = vcmp.eq.s32.totalorder %v431, 1
          %vm448 = vcmp.eq.s32.totalorder %v432, 1
          %vm449 = vcmp.eq.s32.totalorder %v433, 1
          %v450 = vsel %vm434, %v335, 0.0
          %v451 = vsel %vm434, %v336, 0.0
          %v452 = vsel %vm435, %v337, 0.0
          %v453 = vsel %vm435, %v338, 0.0
          %v454 = vsel %vm436, %v339, 0.0
          %v455 = vsel %vm436, %v340, 0.0
          %v456 = vsel %vm437, %v341, 0.0
          %v457 = vsel %vm437, %v342, 0.0
          %v458 = vsel %vm438, %v343, 0.0
          %v459 = vsel %vm438, %v344, 0.0
          %v460 = vsel %vm439, %v345, 0.0
          %v461 = vsel %vm439, %v346, 0.0
          %v462 = vsel %vm440, %v347, 0.0
          %v463 = vsel %vm440, %v348, 0.0
          %v464 = vsel %vm441, %v349, 0.0
          %v465 = vsel %vm441, %v350, 0.0
          %v466 = vsel %vm442, %v351, 0.0
          %v467 = vsel %vm442, %v352, 0.0
          %v468 = vsel %vm443, %v353, 0.0
          %v469 = vsel %vm443, %v354, 0.0
          %v470 = vsel %vm444, %v355, 0.0
          %v471 = vsel %vm444, %v356, 0.0
          %v472 = vsel %vm445, %v357, 0.0
          %v473 = vsel %vm445, %v358, 0.0
          %v474 = vsel %vm446, %v359, 0.0
          %v475 = vsel %vm446, %v360, 0.0
          %v476 = vsel %vm447, %v361, 0.0
          %v477 = vsel %vm447, %v362, 0.0
          %v478 = vsel %vm448, %v363, 0.0
          %v479 = vsel %vm448, %v364, 0.0
          %v480 = vsel %vm449, %v365, 0.0
          %v481 = vsel %vm449, %v366, 0.0
          %v482 = vld [vmem:[#allocation2] sm:$0x3]
          %v483 = vadd.f32 %v450, %v452
          %v484 = vadd.f32 %v483, %v454
          %v485 = vadd.f32 %v484, %v456
          %v486 = vadd.f32 %v485, %v458
          %v487 = vadd.f32 %v486, %v460
          %v488 = vadd.f32 %v487, %v462
          %v489 = vadd.f32 %v488, %v464
          %v490 = vadd.f32 %v489, %v466
          %v491 = vadd.f32 %v490, %v468
          %v492 = vadd.f32 %v491, %v470
          %v493 = vadd.f32 %v492, %v472
          %v494 = vadd.f32 %v493, %v474
          %v495 = vadd.f32 %v494, %v476
          %v496 = vadd.f32 %v495, %v478
          %v497 = vadd.f32 %v496, %v480
          %v498 = vrot.slane %v497, 4
          %v499 = vadd.f32 %v497, %v498
          %v500 = vrot.slane %v499, 2
          %v501 = vadd.f32 %v499, %v500
          %v502 = vrot.slane %v501, 1
          %v503 = vadd.f32 %v501, %v502
          %v504 = vadd.f32 %v451, %v453
          %v505 = vadd.f32 %v504, %v455
          %v506 = vadd.f32 %v505, %v457
          %v507 = vadd.f32 %v506, %v459
          %v508 = vadd.f32 %v507, %v461
          %v509 = vadd.f32 %v508, %v463
          %v510 = vadd.f32 %v509, %v465
          %v511 = vadd.f32 %v510, %v467
          %v512 = vadd.f32 %v511, %v469
          %v513 = vadd.f32 %v512, %v471
          %v514 = vadd.f32 %v513, %v473
          %v515 = vadd.f32 %v514, %v475
          %v516 = vadd.f32 %v515, %v477
          %v517 = vadd.f32 %v516, %v479
          %v518 = vadd.f32 %v517, %v481
          %v519 = vrot.slane %v518, 4
          %v520 = vadd.f32 %v518, %v519
          %v521 = vrot.slane %v520, 2
          %v522 = vadd.f32 %v520, %v521
          %v523 = vrot.slane %v522, 1
          %v524 = vadd.f32 %v522, %v523
          %v527 = vcombine.low %v503, %v524
          %v529 = vunpack.c.l.s4 1966171168
          %v530 = vunpack.c.0.s8 %v529
          %v531 = vlaneseq
          %v532 = vshrl.u32 %v531, 7
          %v533 = vsub.s32 %v530, %v532
          %v534 = vrot.slane %v527, %v533
          %v536 = vunpack.c.l.s4 1966171168
          %v537 = vunpack.c.0.s8 %v536
          %v538 = vlaneseq
          %v539 = vshrl.u32 %v538, 7
          %v540 = vsub.s32 %v537, %v539
          %v541 = vrot.slane %v534, %v540
          %v543 = vadd.f32 %v482, %v541
          %v544 = vlaneseq
          %vm545 = vcmp.ge.s32.totalorder %v544, 0
          %vm546 = vcmp.lt.s32.totalorder %v544, 256
          %vm547 = vmand %vm545, %vm546
          %548 = vst.msk [vmem:[#allocation2] sm:$0x3] %vm547, %v543
        $region56: #{tpu_custom_call.1} parent=35 // pred_fallthru
          _
        %p549 = scmp.eq.s32.totalorder %s24, 2
        // Predicated region
        $region57: #{tpu_custom_call.1} parent=35 // pred_check
          %p550 = pneg %p549
        $region58: #{tpu_custom_call.1} parent=35 // pred_check_branch
          %552 = sbr.rel (%p550) target = $region60
        $region59: #{tpu_custom_call.1} parent=35 // pred_region
          %v553 = vld [vmem:[#allocation2] sm:$0x3]
          %v554 = vmul.f32 %v553, 0.0052083335
          %v555 = vxor.u32 %v554, 2147483648
          %v556 = vmul.f32 %v555, 1.442695
          %v557 = vpow.pop %v556
          %v558 = vadd.f32 %v557, 1.0
          %v559 = vrcp.pop %v558
          %v560 = vmul.f32 1.0, %v559
          %v561 = vld [vmem:[#allocation11] sm:$0xff]
          %v562 = vld [vmem:[#allocation11 + $0x8] sm:$0xff]
          %v563 = vld [vmem:[#allocation11 + $0x10] sm:$0xff]
          %v564 = vld [vmem:[#allocation11 + $0x18] sm:$0xff]
          %v565 = vld [vmem:[#allocation11 + $0x20] sm:$0xff]
          %v566 = vld [vmem:[#allocation11 + $0x28] sm:$0xff]
          %v567 = vld [vmem:[#allocation11 + $0x30] sm:$0xff]
          %v568 = vld [vmem:[#allocation11 + $0x38] sm:$0xff]
          %v569 = vld [vmem:[#allocation11 + $0x40] sm:$0xff]
          %v570 = vld [vmem:[#allocation11 + $0x48] sm:$0xff]
          %v571 = vld [vmem:[#allocation11 + $0x50] sm:$0xff]
          %v572 = vld [vmem:[#allocation11 + $0x58] sm:$0xff]
          %v573 = vld [vmem:[#allocation11 + $0x60] sm:$0xff]
          %v574 = vld [vmem:[#allocation11 + $0x68] sm:$0xff]
          %v575 = vld [vmem:[#allocation11 + $0x70] sm:$0xff]
          %v576 = vld [vmem:[#allocation11 + $0x78] sm:$0xff]
          %v577 = vld [vmem:[#allocation11 + $0x80] sm:$0xff]
          %v578 = vld [vmem:[#allocation11 + $0x88] sm:$0xff]
          %v579 = vld [vmem:[#allocation11 + $0x90] sm:$0xff]
          %v580 = vld [vmem:[#allocation11 + $0x98] sm:$0xff]
          %v581 = vld [vmem:[#allocation11 + $0xa0] sm:$0xff]
          %v582 = vld [vmem:[#allocation11 + $0xa8] sm:$0xff]
          %v583 = vld [vmem:[#allocation11 + $0xb0] sm:$0xff]
          %v584 = vld [vmem:[#allocation11 + $0xb8] sm:$0xff]
          %v585 = vld [vmem:[#allocation11 + $0xc0] sm:$0xff]
          %v586 = vld [vmem:[#allocation11 + $0xc8] sm:$0xff]
          %v587 = vld [vmem:[#allocation11 + $0xd0] sm:$0xff]
          %v588 = vld [vmem:[#allocation11 + $0xd8] sm:$0xff]
          %v589 = vld [vmem:[#allocation11 + $0xe0] sm:$0xff]
          %v590 = vld [vmem:[#allocation11 + $0xe8] sm:$0xff]
          %v591 = vld [vmem:[#allocation11 + $0xf0] sm:$0xff]
          %v592 = vld [vmem:[#allocation11 + $0xf8] sm:$0xff]
          %v593 = vld [vmem:[#allocation11 + $0x100] sm:$0xff]
          %v594 = vld [vmem:[#allocation11 + $0x108] sm:$0xff]
          %v595 = vld [vmem:[#allocation11 + $0x110] sm:$0xff]
          %v596 = vld [vmem:[#allocation11 + $0x118] sm:$0xff]
          %v597 = vld [vmem:[#allocation11 + $0x120] sm:$0xff]
          %v598 = vld [vmem:[#allocation11 + $0x128] sm:$0xff]
          %v599 = vld [vmem:[#allocation11 + $0x130] sm:$0xff]
          %v600 = vld [vmem:[#allocation11 + $0x138] sm:$0xff]
          %v601 = vld [vmem:[#allocation11 + $0x140] sm:$0xff]
          %v602 = vld [vmem:[#allocation11 + $0x148] sm:$0xff]
          %v603 = vld [vmem:[#allocation11 + $0x150] sm:$0xff]
          %v604 = vld [vmem:[#allocation11 + $0x158] sm:$0xff]
          %v605 = vld [vmem:[#allocation11 + $0x160] sm:$0xff]
          %v606 = vld [vmem:[#allocation11 + $0x168] sm:$0xff]
          %v607 = vld [vmem:[#allocation11 + $0x170] sm:$0xff]
          %v608 = vld [vmem:[#allocation11 + $0x178] sm:$0xff]
          %v609 = vld [vmem:[#allocation11 + $0x180] sm:$0xff]
          %v610 = vld [vmem:[#allocation11 + $0x188] sm:$0xff]
          %v611 = vld [vmem:[#allocation11 + $0x190] sm:$0xff]
          %v612 = vld [vmem:[#allocation11 + $0x198] sm:$0xff]
          %v613 = vld [vmem:[#allocation11 + $0x1a0] sm:$0xff]
          %v614 = vld [vmem:[#allocation11 + $0x1a8] sm:$0xff]
          %v615 = vld [vmem:[#allocation11 + $0x1b0] sm:$0xff]
          %v616 = vld [vmem:[#allocation11 + $0x1b8] sm:$0xff]
          %v617 = vld [vmem:[#allocation11 + $0x1c0] sm:$0xff]
          %v618 = vld [vmem:[#allocation11 + $0x1c8] sm:$0xff]
          %v619 = vld [vmem:[#allocation11 + $0x1d0] sm:$0xff]
          %v620 = vld [vmem:[#allocation11 + $0x1d8] sm:$0xff]
          %v621 = vld [vmem:[#allocation11 + $0x1e0] sm:$0xff]
          %v622 = vld [vmem:[#allocation11 + $0x1e8] sm:$0xff]
          %v623 = vld [vmem:[#allocation11 + $0x1f0] sm:$0xff]
          %v624 = vld [vmem:[#allocation11 + $0x1f8] sm:$0xff]
          %v626 = vlaneseq
          %v627 = vshrl.u32 %v626, 7
          %v628 = vsub.s32 0, %v627
          %v629 = vrot.slane %v560, %v628
          %v630 = vlaneseq
          %v631 = vshrl.u32 %v630, 7
          %v632 = vsub.s32 1, %v631
          %v633 = vrot.slane %v560, %v632
          %v636 = vmul.f32 %v561, %v629
          %v637 = vmul.f32 %v562, %v633
          %v638 = vmul.f32 %v563, %v629
          %v639 = vmul.f32 %v564, %v633
          %v640 = vmul.f32 %v565, %v629
          %v641 = vmul.f32 %v566, %v633
          %v642 = vmul.f32 %v567, %v629
          %v643 = vmul.f32 %v568, %v633
          %v644 = vmul.f32 %v569, %v629
          %v645 = vmul.f32 %v570, %v633
          %v646 = vmul.f32 %v571, %v629
          %v647 = vmul.f32 %v572, %v633
          %v648 = vmul.f32 %v573, %v629
          %v649 = vmul.f32 %v574, %v633
          %v650 = vmul.f32 %v575, %v629
          %v651 = vmul.f32 %v576, %v633
          %v652 = vmul.f32 %v577, %v629
          %v653 = vmul.f32 %v578, %v633
          %v654 = vmul.f32 %v579, %v629
          %v655 = vmul.f32 %v580, %v633
          %v656 = vmul.f32 %v581, %v629
          %v657 = vmul.f32 %v582, %v633
          %v658 = vmul.f32 %v583, %v629
          %v659 = vmul.f32 %v584, %v633
          %v660 = vmul.f32 %v585, %v629
          %v661 = vmul.f32 %v586, %v633
          %v662 = vmul.f32 %v587, %v629
          %v663 = vmul.f32 %v588, %v633
          %v664 = vmul.f32 %v589, %v629
          %v665 = vmul.f32 %v590, %v633
          %v666 = vmul.f32 %v591, %v629
          %v667 = vmul.f32 %v592, %v633
          %v668 = vmul.f32 %v593, %v629
          %v669 = vmul.f32 %v594, %v633
          %v670 = vmul.f32 %v595, %v629
          %v671 = vmul.f32 %v596, %v633
          %v672 = vmul.f32 %v597, %v629
          %v673 = vmul.f32 %v598, %v633
          %v674 = vmul.f32 %v599, %v629
          %v675 = vmul.f32 %v600, %v633
          %v676 = vmul.f32 %v601, %v629
          %v677 = vmul.f32 %v602, %v633
          %v678 = vmul.f32 %v603, %v629
          %v679 = vmul.f32 %v604, %v633
          %v680 = vmul.f32 %v605, %v629
          %v681 = vmul.f32 %v606, %v633
          %v682 = vmul.f32 %v607, %v629
          %v683 = vmul.f32 %v608, %v633
          %v684 = vmul.f32 %v609, %v629
          %v685 = vmul.f32 %v610, %v633
          %v686 = vmul.f32 %v611, %v629
          %v687 = vmul.f32 %v612, %v633
          %v688 = vmul.f32 %v613, %v629
          %v689 = vmul.f32 %v614, %v633
          %v690 = vmul.f32 %v615, %v629
          %v691 = vmul.f32 %v616, %v633
          %v692 = vmul.f32 %v617, %v629
          %v693 = vmul.f32 %v618, %v633
          %v694 = vmul.f32 %v619, %v629
          %v695 = vmul.f32 %v620, %v633
          %v696 = vmul.f32 %v621, %v629
          %v697 = vmul.f32 %v622, %v633
          %v698 = vmul.f32 %v623, %v629
          %v699 = vmul.f32 %v624, %v633
          %v700 = vadd.f32 %v636, %v637
          %701 = vadd.xlane.f32.xlu0 %v700
          %v702 = vpop.xlane.xlu0 %701
          %v703 = vadd.f32 %v638, %v639
          %704 = vadd.xlane.f32.xlu0 %v703
          %v705 = vpop.xlane.xlu0 %704
          %v706 = vadd.f32 %v640, %v641
          %707 = vadd.xlane.f32.xlu0 %v706
          %v708 = vpop.xlane.xlu0 %707
          %v709 = vadd.f32 %v642, %v643
          %710 = vadd.xlane.f32.xlu0 %v709
          %v711 = vpop.xlane.xlu0 %710
          %v712 = vadd.f32 %v644, %v645
          %713 = vadd.xlane.f32.xlu0 %v712
          %v714 = vpop.xlane.xlu0 %713
          %v715 = vadd.f32 %v646, %v647
          %716 = vadd.xlane.f32.xlu0 %v715
          %v717 = vpop.xlane.xlu0 %716
          %v718 = vadd.f32 %v648, %v649
          %719 = vadd.xlane.f32.xlu0 %v718
          %v720 = vpop.xlane.xlu0 %719
          %v721 = vadd.f32 %v650, %v651
          %722 = vadd.xlane.f32.xlu0 %v721
          %v723 = vpop.xlane.xlu0 %722
          %v724 = vadd.f32 %v652, %v653
          %725 = vadd.xlane.f32.xlu0 %v724
          %v726 = vpop.xlane.xlu0 %725
          %v727 = vadd.f32 %v654, %v655
          %728 = vadd.xlane.f32.xlu0 %v727
          %v729 = vpop.xlane.xlu0 %728
          %v730 = vadd.f32 %v656, %v657
          %731 = vadd.xlane.f32.xlu0 %v730
          %v732 = vpop.xlane.xlu0 %731
          %v733 = vadd.f32 %v658, %v659
          %734 = vadd.xlane.f32.xlu0 %v733
          %v735 = vpop.xlane.xlu0 %734
          %v736 = vadd.f32 %v660, %v661
          %737 = vadd.xlane.f32.xlu0 %v736
          %v738 = vpop.xlane.xlu0 %737
          %v739 = vadd.f32 %v662, %v663
          %740 = vadd.xlane.f32.xlu0 %v739
          %v741 = vpop.xlane.xlu0 %740
          %v742 = vadd.f32 %v664, %v665
          %743 = vadd.xlane.f32.xlu0 %v742
          %v744 = vpop.xlane.xlu0 %743
          %v745 = vadd.f32 %v666, %v667
          %746 = vadd.xlane.f32.xlu0 %v745
          %v747 = vpop.xlane.xlu0 %746
          %v748 = vadd.f32 %v668, %v669
          %749 = vadd.xlane.f32.xlu0 %v748
          %v750 = vpop.xlane.xlu0 %749
          %v751 = vadd.f32 %v670, %v671
          %752 = vadd.xlane.f32.xlu0 %v751
          %v753 = vpop.xlane.xlu0 %752
          %v754 = vadd.f32 %v672, %v673
          %755 = vadd.xlane.f32.xlu0 %v754
          %v756 = vpop.xlane.xlu0 %755
          %v757 = vadd.f32 %v674, %v675
          %758 = vadd.xlane.f32.xlu0 %v757
          %v759 = vpop.xlane.xlu0 %758
          %v760 = vadd.f32 %v676, %v677
          %761 = vadd.xlane.f32.xlu0 %v760
          %v762 = vpop.xlane.xlu0 %761
          %v763 = vadd.f32 %v678, %v679
          %764 = vadd.xlane.f32.xlu0 %v763
          %v765 = vpop.xlane.xlu0 %764
          %v766 = vadd.f32 %v680, %v681
          %767 = vadd.xlane.f32.xlu0 %v766
          %v768 = vpop.xlane.xlu0 %767
          %v769 = vadd.f32 %v682, %v683
          %770 = vadd.xlane.f32.xlu0 %v769
          %v771 = vpop.xlane.xlu0 %770
          %v772 = vadd.f32 %v684, %v685
          %773 = vadd.xlane.f32.xlu0 %v772
          %v774 = vpop.xlane.xlu0 %773
          %v775 = vadd.f32 %v686, %v687
          %776 = vadd.xlane.f32.xlu0 %v775
          %v777 = vpop.xlane.xlu0 %776
          %v778 = vadd.f32 %v688, %v689
          %779 = vadd.xlane.f32.xlu0 %v778
          %v780 = vpop.xlane.xlu0 %779
          %v781 = vadd.f32 %v690, %v691
          %782 = vadd.xlane.f32.xlu0 %v781
          %v783 = vpop.xlane.xlu0 %782
          %v784 = vadd.f32 %v692, %v693
          %785 = vadd.xlane.f32.xlu0 %v784
          %v786 = vpop.xlane.xlu0 %785
          %v787 = vadd.f32 %v694, %v695
          %788 = vadd.xlane.f32.xlu0 %v787
          %v789 = vpop.xlane.xlu0 %788
          %v790 = vadd.f32 %v696, %v697
          %791 = vadd.xlane.f32.xlu0 %v790
          %v792 = vpop.xlane.xlu0 %791
          %v793 = vadd.f32 %v698, %v699
          %794 = vadd.xlane.f32.xlu0 %v793
          %v795 = vpop.xlane.xlu0 %794
          %vm796 = vcmask 7168
          %797 = vst.msk [vmem:[#allocation3] sm:$0xff] %vm796, %v702
          %798 = vst.msk [vmem:[#allocation3 + $0x8] sm:$0xff] %vm796, %v705
          %799 = vst.msk [vmem:[#allocation3 + $0x10] sm:$0xff] %vm796, %v708
          %800 = vst.msk [vmem:[#allocation3 + $0x18] sm:$0xff] %vm796, %v711
          %801 = vst.msk [vmem:[#allocation3 + $0x20] sm:$0xff] %vm796, %v714
          %802 = vst.msk [vmem:[#allocation3 + $0x28] sm:$0xff] %vm796, %v717
          %803 = vst.msk [vmem:[#allocation3 + $0x30] sm:$0xff] %vm796, %v720
          %804 = vst.msk [vmem:[#allocation3 + $0x38] sm:$0xff] %vm796, %v723
          %805 = vst.msk [vmem:[#allocation3 + $0x40] sm:$0xff] %vm796, %v726
          %806 = vst.msk [vmem:[#allocation3 + $0x48] sm:$0xff] %vm796, %v729
          %807 = vst.msk [vmem:[#allocation3 + $0x50] sm:$0xff] %vm796, %v732
          %808 = vst.msk [vmem:[#allocation3 + $0x58] sm:$0xff] %vm796, %v735
          %809 = vst.msk [vmem:[#allocation3 + $0x60] sm:$0xff] %vm796, %v738
          %810 = vst.msk [vmem:[#allocation3 + $0x68] sm:$0xff] %vm796, %v741
          %811 = vst.msk [vmem:[#allocation3 + $0x70] sm:$0xff] %vm796, %v744
          %812 = vst.msk [vmem:[#allocation3 + $0x78] sm:$0xff] %vm796, %v747
          %813 = vst.msk [vmem:[#allocation3 + $0x80] sm:$0xff] %vm796, %v750
          %814 = vst.msk [vmem:[#allocation3 + $0x88] sm:$0xff] %vm796, %v753
          %815 = vst.msk [vmem:[#allocation3 + $0x90] sm:$0xff] %vm796, %v756
          %816 = vst.msk [vmem:[#allocation3 + $0x98] sm:$0xff] %vm796, %v759
          %817 = vst.msk [vmem:[#allocation3 + $0xa0] sm:$0xff] %vm796, %v762
          %818 = vst.msk [vmem:[#allocation3 + $0xa8] sm:$0xff] %vm796, %v765
          %819 = vst.msk [vmem:[#allocation3 + $0xb0] sm:$0xff] %vm796, %v768
          %820 = vst.msk [vmem:[#allocation3 + $0xb8] sm:$0xff] %vm796, %v771
          %821 = vst.msk [vmem:[#allocation3 + $0xc0] sm:$0xff] %vm796, %v774
          %822 = vst.msk [vmem:[#allocation3 + $0xc8] sm:$0xff] %vm796, %v777
          %823 = vst.msk [vmem:[#allocation3 + $0xd0] sm:$0xff] %vm796, %v780
          %824 = vst.msk [vmem:[#allocation3 + $0xd8] sm:$0xff] %vm796, %v783
          %825 = vst.msk [vmem:[#allocation3 + $0xe0] sm:$0xff] %vm796, %v786
          %826 = vst.msk [vmem:[#allocation3 + $0xe8] sm:$0xff] %vm796, %v789
          %827 = vst.msk [vmem:[#allocation3 + $0xf0] sm:$0xff] %vm796, %v792
          %828 = vst.msk [vmem:[#allocation3 + $0xf8] sm:$0xff] %vm796, %v795
        $region60: #{tpu_custom_call.1} parent=35 // pred_fallthru
          _
        %p829 = scmp.ge.s32.totalorder %s24, 2
        %p830 = scmp.lt.s32.totalorder %s24, 4
        %p831 = pnand %p829, %p830
        %p832 = pneg %p831
        // Predicated region
        $region61: #{tpu_custom_call.1} parent=35 // pred_check
          _
        $region62: #{tpu_custom_call.1} parent=35 // pred_check_branch
          %834 = sbr.rel (%p831) target = $region64
        $region63: #{tpu_custom_call.1} parent=35 // pred_region
          %v835 = vld [vmem:[%s262] sm:$0xff]
          %v836 = vld [vmem:[%s262 + $0x8] sm:$0xff]
          %v837 = vld [vmem:[%s262 + $0x10] sm:$0xff]
          %v838 = vld [vmem:[%s262 + $0x18] sm:$0xff]
          %v839 = vld [vmem:[%s262 + $0x20] sm:$0xff]
          %v840 = vld [vmem:[%s262 + $0x28] sm:$0xff]
          %v841 = vld [vmem:[%s262 + $0x30] sm:$0xff]
          %v842 = vld [vmem:[%s262 + $0x38] sm:$0xff]
          %v843 = vld [vmem:[%s262 + $0x40] sm:$0xff]
          %v844 = vld [vmem:[%s262 + $0x48] sm:$0xff]
          %v845 = vld [vmem:[%s262 + $0x50] sm:$0xff]
          %v846 = vld [vmem:[%s262 + $0x58] sm:$0xff]
          %v847 = vld [vmem:[%s262 + $0x60] sm:$0xff]
          %v848 = vld [vmem:[%s262 + $0x68] sm:$0xff]
          %v849 = vld [vmem:[%s262 + $0x70] sm:$0xff]
          %v850 = vld [vmem:[%s262 + $0x78] sm:$0xff]
          %v851 = vld [vmem:[%s262 + $0x80] sm:$0xff]
          %v852 = vld [vmem:[%s262 + $0x88] sm:$0xff]
          %v853 = vld [vmem:[%s262 + $0x90] sm:$0xff]
          %v854 = vld [vmem:[%s262 + $0x98] sm:$0xff]
          %v855 = vld [vmem:[%s262 + $0xa0] sm:$0xff]
          %v856 = vld [vmem:[%s262 + $0xa8] sm:$0xff]
          %v857 = vld [vmem:[%s262 + $0xb0] sm:$0xff]
          %v858 = vld [vmem:[%s262 + $0xb8] sm:$0xff]
          %v859 = vld [vmem:[%s262 + $0xc0] sm:$0xff]
          %v860 = vld [vmem:[%s262 + $0xc8] sm:$0xff]
          %v861 = vld [vmem:[%s262 + $0xd0] sm:$0xff]
          %v862 = vld [vmem:[%s262 + $0xd8] sm:$0xff]
          %v863 = vld [vmem:[%s262 + $0xe0] sm:$0xff]
          %v864 = vld [vmem:[%s262 + $0xe8] sm:$0xff]
          %v865 = vld [vmem:[%s262 + $0xf0] sm:$0xff]
          %v866 = vld [vmem:[%s262 + $0xf8] sm:$0xff]
          %s867 = ssub.s32 %s24, 2
          %s868 = smul.u32 %s867, 128
          %v869 = vld [vmem:[#allocation3] sm:$0xff]
          %v870 = vld [vmem:[#allocation3 + $0x8] sm:$0xff]
          %v871 = vld [vmem:[#allocation3 + $0x10] sm:$0xff]
          %v872 = vld [vmem:[#allocation3 + $0x18] sm:$0xff]
          %v873 = vld [vmem:[#allocation3 + $0x20] sm:$0xff]
          %v874 = vld [vmem:[#allocation3 + $0x28] sm:$0xff]
          %v875 = vld [vmem:[#allocation3 + $0x30] sm:$0xff]
          %v876 = vld [vmem:[#allocation3 + $0x38] sm:$0xff]
          %v877 = vld [vmem:[#allocation3 + $0x40] sm:$0xff]
          %v878 = vld [vmem:[#allocation3 + $0x48] sm:$0xff]
          %v879 = vld [vmem:[#allocation3 + $0x50] sm:$0xff]
          %v880 = vld [vmem:[#allocation3 + $0x58] sm:$0xff]
          %v881 = vld [vmem:[#allocation3 + $0x60] sm:$0xff]
          %v882 = vld [vmem:[#allocation3 + $0x68] sm:$0xff]
          %v883 = vld [vmem:[#allocation3 + $0x70] sm:$0xff]
          %v884 = vld [vmem:[#allocation3 + $0x78] sm:$0xff]
          %v885 = vld [vmem:[#allocation3 + $0x80] sm:$0xff]
          %v886 = vld [vmem:[#allocation3 + $0x88] sm:$0xff]
          %v887 = vld [vmem:[#allocation3 + $0x90] sm:$0xff]
          %v888 = vld [vmem:[#allocation3 + $0x98] sm:$0xff]
          %v889 = vld [vmem:[#allocation3 + $0xa0] sm:$0xff]
          %v890 = vld [vmem:[#allocation3 + $0xa8] sm:$0xff]
          %v891 = vld [vmem:[#allocation3 + $0xb0] sm:$0xff]
          %v892 = vld [vmem:[#allocation3 + $0xb8] sm:$0xff]
          %v893 = vld [vmem:[#allocation3 + $0xc0] sm:$0xff]
          %v894 = vld [vmem:[#allocation3 + $0xc8] sm:$0xff]
          %v895 = vld [vmem:[#allocation3 + $0xd0] sm:$0xff]
          %v896 = vld [vmem:[#allocation3 + $0xd8] sm:$0xff]
          %v897 = vld [vmem:[#allocation3 + $0xe0] sm:$0xff]
          %v898 = vld [vmem:[#allocation3 + $0xe8] sm:$0xff]
          %v899 = vld [vmem:[#allocation3 + $0xf0] sm:$0xff]
          %v900 = vld [vmem:[#allocation3 + $0xf8] sm:$0xff]
          %v901 = vld [vmem:[#allocation5] sm:$0x1]
          %v903 = vlaneseq
          %v904 = vshrl.u32 %v903, 7
          %v905 = vsub.s32 0, %v904
          %v906 = vrot.slane %v901, %v905
          %908 = vmatprep.subr.mxu0 0.0
          %909 = vmatpush1.msra.mxu0 %v869
          %910 = vmatprep.subr.mxu0 0.0
          %911 = vmatpush1.msra.mxu0 %v870
          %912 = vmatprep.subr.mxu0 0.0
          %913 = vmatpush1.msra.mxu0 %v871
          %914 = vmatprep.subr.mxu0 0.0
          %915 = vmatpush1.msra.mxu0 %v872
          %916 = vmatprep.subr.mxu0 0.0
          %917 = vmatpush1.msra.mxu0 %v873
          %918 = vmatprep.subr.mxu0 0.0
          %919 = vmatpush1.msra.mxu0 %v874
          %920 = vmatprep.subr.mxu0 0.0
          %921 = vmatpush1.msra.mxu0 %v875
          %922 = vmatprep.subr.mxu0 0.0
          %923 = vmatpush1.msra.mxu0 %v876
          %924 = vmatprep.subr.mxu0 0.0
          %925 = vmatpush1.msra.mxu0 %v877
          %926 = vmatprep.subr.mxu0 0.0
          %927 = vmatpush1.msra.mxu0 %v878
          %928 = vmatprep.subr.mxu0 0.0
          %929 = vmatpush1.msra.mxu0 %v879
          %930 = vmatprep.subr.mxu0 0.0
          %931 = vmatpush1.msra.mxu0 %v880
          %932 = vmatprep.subr.mxu0 0.0
          %933 = vmatpush1.msra.mxu0 %v881
          %934 = vmatprep.subr.mxu0 0.0
          %935 = vmatpush1.msra.mxu0 %v882
          %936 = vmatprep.subr.mxu0 0.0
          %937 = vmatpush1.msra.mxu0 %v883
          %938 = vmatprep.subr.mxu0 0.0
          %939 = vmatpush1.msra.mxu0 %v884
          %940 = vmatprep.subr.mxu0 0.0
          %941 = vmatpush1.msra.mxu0 %v885
          %942 = vmatprep.subr.mxu0 0.0
          %943 = vmatpush1.msra.mxu0 %v886
          %944 = vmatprep.subr.mxu0 0.0
          %945 = vmatpush1.msra.mxu0 %v887
          %946 = vmatprep.subr.mxu0 0.0
          %947 = vmatpush1.msra.mxu0 %v888
          %948 = vmatprep.subr.mxu0 0.0
          %949 = vmatpush1.msra.mxu0 %v889
          %950 = vmatprep.subr.mxu0 0.0
          %951 = vmatpush1.msra.mxu0 %v890
          %952 = vmatprep.subr.mxu0 0.0
          %953 = vmatpush1.msra.mxu0 %v891
          %954 = vmatprep.subr.mxu0 0.0
          %955 = vmatpush1.msra.mxu0 %v892
          %956 = vmatprep.subr.mxu0 0.0
          %957 = vmatpush1.msra.mxu0 %v893
          %958 = vmatprep.subr.mxu0 0.0
          %959 = vmatpush1.msra.mxu0 %v894
          %960 = vmatprep.subr.mxu0 0.0
          %961 = vmatpush1.msra.mxu0 %v895
          %962 = vmatprep.subr.mxu0 0.0
          %963 = vmatpush1.msra.mxu0 %v896
          %964 = vmatprep.subr.mxu0 0.0
          %965 = vmatpush1.msra.mxu0 %v897
          %966 = vmatprep.subr.mxu0 0.0
          %967 = vmatpush1.msra.mxu0 %v898
          %968 = vmatprep.subr.mxu0 0.0
          %969 = vmatpush1.msra.mxu0 %v899
          %970 = vmatprep.subr.mxu0 0.0
          %971 = vmatpush1.msra.mxu0 %v900
          %972 = vmatprep.mubr.f32.mxu0 %v836
          %973 = vmatmul.mubr.f32.gmra.mrb[0].mxu0 %v835
          %v974 = vpop.f32.mrb[0].mxu0
          %v975 = vadd.f32 %v906, %v974
          %v976 = vpop.f32.mrb[0].mxu0
          %977 = vmatprep.mubr.f32.mxu0 %v838
          %978 = vmatmul.mubr.f32.gmra.mrb[0].mxu0 %v837
          %v979 = vpop.f32.mrb[0].mxu0
          %v980 = vadd.f32 %v906, %v979
          %v981 = vpop.f32.mrb[0].mxu0
          %982 = vmatprep.mubr.f32.mxu0 %v840
          %983 = vmatmul.mubr.f32.gmra.mrb[0].mxu0 %v839
          %v984 = vpop.f32.mrb[0].mxu0
          %v985 = vadd.f32 %v906, %v984
          %v986 = vpop.f32.mrb[0].mxu0
          %987 = vmatprep.mubr.f32.mxu0 %v842
          %988 = vmatmul.mubr.f32.gmra.mrb[0].mxu0 %v841
          %v989 = vpop.f32.mrb[0].mxu0
          %v990 = vadd.f32 %v906, %v989
          %v991 = vpop.f32.mrb[0].mxu0
          %992 = vmatprep.mubr.f32.mxu0 %v844
          %993 = vmatmul.mubr.f32.gmra.mrb[0].mxu0 %v843
          %v994 = vpop.f32.mrb[0].mxu0
          %v995 = vadd.f32 %v906, %v994
          %v996 = vpop.f32.mrb[0].mxu0
          %997 = vmatprep.mubr.f32.mxu0 %v846
          %998 = vmatmul.mubr.f32.gmra.mrb[0].mxu0 %v845
          %v999 = vpop.f32.mrb[0].mxu0
          %v1000 = vadd.f32 %v906, %v999
          %v1001 = vpop.f32.mrb[0].mxu0
          %1002 = vmatprep.mubr.f32.mxu0 %v848
          %1003 = vmatmul.mubr.f32.gmra.mrb[0].mxu0 %v847
          %v1004 = vpop.f32.mrb[0].mxu0
          %v1005 = vadd.f32 %v906, %v1004
          %v1006 = vpop.f32.mrb[0].mxu0
          %1007 = vmatprep.mubr.f32.mxu0 %v850
          %1008 = vmatmul.mubr.f32.gmra.mrb[0].mxu0 %v849
          %v1009 = vpop.f32.mrb[0].mxu0
          %v1010 = vadd.f32 %v906, %v1009
          %v1011 = vpop.f32.mrb[0].mxu0
          %1012 = vmatprep.mubr.f32.mxu0 %v852
          %1013 = vmatmul.mubr.f32.gmra.mrb[0].mxu0 %v851
          %v1014 = vpop.f32.mrb[0].mxu0
          %v1015 = vadd.f32 %v906, %v1014
          %v1016 = vpop.f32.mrb[0].mxu0
          %1017 = vmatprep.mubr.f32.mxu0 %v854
          %1018 = vmatmul.mubr.f32.gmra.mrb[0].mxu0 %v853
          %v1019 = vpop.f32.mrb[0].mxu0
          %v1020 = vadd.f32 %v906, %v1019
          %v1021 = vpop.f32.mrb[0].mxu0
          %1022 = vmatprep.mubr.f32.mxu0 %v856
          %1023 = vmatmul.mubr.f32.gmra.mrb[0].mxu0 %v855
          %v1024 = vpop.f32.mrb[0].mxu0
          %v1025 = vadd.f32 %v906, %v1024
          %v1026 = vpop.f32.mrb[0].mxu0
          %1027 = vmatprep.mubr.f32.mxu0 %v858
          %1028 = vmatmul.mubr.f32.gmra.mrb[0].mxu0 %v857
          %v1029 = vpop.f32.mrb[0].mxu0
          %v1030 = vadd.f32 %v906, %v1029
          %v1031 = vpop.f32.mrb[0].mxu0
          %1032 = vmatprep.mubr.f32.mxu0 %v860
          %1033 = vmatmul.mubr.f32.gmra.mrb[0].mxu0 %v859
          %v1034 = vpop.f32.mrb[0].mxu0
          %v1035 = vadd.f32 %v906, %v1034
          %v1036 = vpop.f32.mrb[0].mxu0
          %1037 = vmatprep.mubr.f32.mxu0 %v862
          %1038 = vmatmul.mubr.f32.gmra.mrb[0].mxu0 %v861
          %v1039 = vpop.f32.mrb[0].mxu0
          %v1040 = vadd.f32 %v906, %v1039
          %v1041 = vpop.f32.mrb[0].mxu0
          %1042 = vmatprep.mubr.f32.mxu0 %v864
          %1043 = vmatmul.mubr.f32.gmra.mrb[0].mxu0 %v863
          %v1044 = vpop.f32.mrb[0].mxu0
          %v1045 = vadd.f32 %v906, %v1044
          %v1046 = vpop.f32.mrb[0].mxu0
          %1047 = vmatprep.mubr.f32.mxu0 %v866
          %1048 = vmatmul.mubr.f32.gmra.mrb[0].mxu0 %v865
          %v1049 = vpop.f32.mrb[0].mxu0
          %v1050 = vadd.f32 %v906, %v1049
          %v1051 = vpop.f32.mrb[0].mxu0
          %1052 = vdwg.mxu0
          %v1053 = vsub.f32 0.0, %v975
          %v1054 = vsub.f32 0.0, %v980
          %v1055 = vsub.f32 0.0, %v985
          %v1056 = vsub.f32 0.0, %v990
          %v1057 = vsub.f32 0.0, %v995
          %v1058 = vsub.f32 0.0, %v1000
          %v1059 = vsub.f32 0.0, %v1005
          %v1060 = vsub.f32 0.0, %v1010
          %v1061 = vsub.f32 0.0, %v1015
          %v1062 = vsub.f32 0.0, %v1020
          %v1063 = vsub.f32 0.0, %v1025
          %v1064 = vsub.f32 0.0, %v1030
          %v1065 = vsub.f32 0.0, %v1035
          %v1066 = vsub.f32 0.0, %v1040
          %v1067 = vsub.f32 0.0, %v1045
          %v1068 = vsub.f32 0.0, %v1050
          %v1069 = vmax.f32 %v1053, 0.0
          %v1070 = vmax.f32 %v1054, 0.0
          %v1071 = vmax.f32 %v1055, 0.0
          %v1072 = vmax.f32 %v1056, 0.0
          %v1073 = vmax.f32 %v1057, 0.0
          %v1074 = vmax.f32 %v1058, 0.0
          %v1075 = vmax.f32 %v1059, 0.0
          %v1076 = vmax.f32 %v1060, 0.0
          %v1077 = vmax.f32 %v1061, 0.0
          %v1078 = vmax.f32 %v1062, 0.0
          %v1079 = vmax.f32 %v1063, 0.0
          %v1080 = vmax.f32 %v1064, 0.0
          %v1081 = vmax.f32 %v1065, 0.0
          %v1082 = vmax.f32 %v1066, 0.0
          %v1083 = vmax.f32 %v1067, 0.0
          %v1084 = vmax.f32 %v1068, 0.0
          %v1085 = vand.u32 2147483647, %v1053
          %v1086 = vand.u32 2147483647, %v1054
          %v1087 = vand.u32 2147483647, %v1055
          %v1088 = vand.u32 2147483647, %v1056
          %v1089 = vand.u32 2147483647, %v1057
          %v1090 = vand.u32 2147483647, %v1058
          %v1091 = vand.u32 2147483647, %v1059
          %v1092 = vand.u32 2147483647, %v1060
          %v1093 = vand.u32 2147483647, %v1061
          %v1094 = vand.u32 2147483647, %v1062
          %v1095 = vand.u32 2147483647, %v1063
          %v1096 = vand.u32 2147483647, %v1064
          %v1097 = vand.u32 2147483647, %v1065
          %v1098 = vand.u32 2147483647, %v1066
          %v1099 = vand.u32 2147483647, %v1067
          %v1100 = vand.u32 2147483647, %v1068
          %v1101 = vsub.f32 0.0, %v1085
          %v1102 = vsub.f32 0.0, %v1086
          %v1103 = vsub.f32 0.0, %v1087
          %v1104 = vsub.f32 0.0, %v1088
          %v1105 = vsub.f32 0.0, %v1089
          %v1106 = vsub.f32 0.0, %v1090
          %v1107 = vsub.f32 0.0, %v1091
          %v1108 = vsub.f32 0.0, %v1092
          %v1109 = vsub.f32 0.0, %v1093
          %v1110 = vsub.f32 0.0, %v1094
          %v1111 = vsub.f32 0.0, %v1095
          %v1112 = vsub.f32 0.0, %v1096
          %v1113 = vsub.f32 0.0, %v1097
          %v1114 = vsub.f32 0.0, %v1098
          %v1115 = vsub.f32 0.0, %v1099
          %v1116 = vsub.f32 0.0, %v1100
          %v1117 = vmul.f32 %v1101, 1.442695
          %v1118 = vpow.pop %v1117
          %v1119 = vmul.f32 %v1102, 1.442695
          %v1120 = vpow.pop %v1119
          %v1121 = vmul.f32 %v1103, 1.442695
          %v1122 = vpow.pop %v1121
          %v1123 = vmul.f32 %v1104, 1.442695
          %v1124 = vpow.pop %v1123
          %v1125 = vmul.f32 %v1105, 1.442695
          %v1126 = vpow.pop %v1125
          %v1127 = vmul.f32 %v1106, 1.442695
          %v1128 = vpow.pop %v1127
          %v1129 = vmul.f32 %v1107, 1.442695
          %v1130 = vpow.pop %v1129
          %v1131 = vmul.f32 %v1108, 1.442695
          %v1132 = vpow.pop %v1131
          %v1133 = vmul.f32 %v1109, 1.442695
          %v1134 = vpow.pop %v1133
          %v1135 = vmul.f32 %v1110, 1.442695
          %v1136 = vpow.pop %v1135
          %v1137 = vmul.f32 %v1111, 1.442695
          %v1138 = vpow.pop %v1137
          %v1139 = vmul.f32 %v1112, 1.442695
          %v1140 = vpow.pop %v1139
          %v1141 = vmul.f32 %v1113, 1.442695
          %v1142 = vpow.pop %v1141
          %v1143 = vmul.f32 %v1114, 1.442695
          %v1144 = vpow.pop %v1143
          %v1145 = vmul.f32 %v1115, 1.442695
          %v1146 = vpow.pop %v1145
          %v1147 = vmul.f32 %v1116, 1.442695
          %v1148 = vpow.pop %v1147
          %v1149 = vadd.f32 %v1118, 1.0
          %v1150 = vlog2.pop %v1149
          %v1151 = vmul.f32 %v1150, 0.6931472
          %v1152 = vmul.f32 -0.5, %v1118
          %v1153 = vadd.f32 %v1152, 1.0
          %v1154 = vmul.f32 %v1153, %v1118
          %v1155 = vand.u32 2147483647, %v1118
          %vm1156 = vcmp.lt.f32.partialorder %v1155, 0.0004427343
          %v1157 = vsel %vm1156, %v1154, %v1151
          %v1158 = vadd.f32 %v1120, 1.0
          %v1159 = vlog2.pop %v1158
          %v1160 = vmul.f32 %v1159, 0.6931472
          %v1161 = vmul.f32 -0.5, %v1120
          %v1162 = vadd.f32 %v1161, 1.0
          %v1163 = vmul.f32 %v1162, %v1120
          %v1164 = vand.u32 2147483647, %v1120
          %vm1165 = vcmp.lt.f32.partialorder %v1164, 0.0004427343
          %v1166 = vsel %vm1165, %v1163, %v1160
          %v1167 = vadd.f32 %v1122, 1.0
          %v1168 = vlog2.pop %v1167
          %v1169 = vmul.f32 %v1168, 0.6931472
          %v1170 = vmul.f32 -0.5, %v1122
          %v1171 = vadd.f32 %v1170, 1.0
          %v1172 = vmul.f32 %v1171, %v1122
          %v1173 = vand.u32 2147483647, %v1122
          %vm1174 = vcmp.lt.f32.partialorder %v1173, 0.0004427343
          %v1175 = vsel %vm1174, %v1172, %v1169
          %v1176 = vadd.f32 %v1124, 1.0
          %v1177 = vlog2.pop %v1176
          %v1178 = vmul.f32 %v1177, 0.6931472
          %v1179 = vmul.f32 -0.5, %v1124
          %v1180 = vadd.f32 %v1179, 1.0
          %v1181 = vmul.f32 %v1180, %v1124
          %v1182 = vand.u32 2147483647, %v1124
          %vm1183 = vcmp.lt.f32.partialorder %v1182, 0.0004427343
          %v1184 = vsel %vm1183, %v1181, %v1178
          %v1185 = vadd.f32 %v1126, 1.0
          %v1186 = vlog2.pop %v1185
          %v1187 = vmul.f32 %v1186, 0.6931472
          %v1188 = vmul.f32 -0.5, %v1126
          %v1189 = vadd.f32 %v1188, 1.0
          %v1190 = vmul.f32 %v1189, %v1126
          %v1191 = vand.u32 2147483647, %v1126
          %vm1192 = vcmp.lt.f32.partialorder %v1191, 0.0004427343
          %v1193 = vsel %vm1192, %v1190, %v1187
          %v1194 = vadd.f32 %v1128, 1.0
          %v1195 = vlog2.pop %v1194
          %v1196 = vmul.f32 %v1195, 0.6931472
          %v1197 = vmul.f32 -0.5, %v1128
          %v1198 = vadd.f32 %v1197, 1.0
          %v1199 = vmul.f32 %v1198, %v1128
          %v1200 = vand.u32 2147483647, %v1128
          %vm1201 = vcmp.lt.f32.partialorder %v1200, 0.0004427343
          %v1202 = vsel %vm1201, %v1199, %v1196
          %v1203 = vadd.f32 %v1130, 1.0
          %v1204 = vlog2.pop %v1203
          %v1205 = vmul.f32 %v1204, 0.6931472
          %v1206 = vmul.f32 -0.5, %v1130
          %v1207 = vadd.f32 %v1206, 1.0
          %v1208 = vmul.f32 %v1207, %v1130
          %v1209 = vand.u32 2147483647, %v1130
          %vm1210 = vcmp.lt.f32.partialorder %v1209, 0.0004427343
          %v1211 = vsel %vm1210, %v1208, %v1205
          %v1212 = vadd.f32 %v1132, 1.0
          %v1213 = vlog2.pop %v1212
          %v1214 = vmul.f32 %v1213, 0.6931472
          %v1215 = vmul.f32 -0.5, %v1132
          %v1216 = vadd.f32 %v1215, 1.0
          %v1217 = vmul.f32 %v1216, %v1132
          %v1218 = vand.u32 2147483647, %v1132
          %vm1219 = vcmp.lt.f32.partialorder %v1218, 0.0004427343
          %v1220 = vsel %vm1219, %v1217, %v1214
          %v1221 = vadd.f32 %v1134, 1.0
          %v1222 = vlog2.pop %v1221
          %v1223 = vmul.f32 %v1222, 0.6931472
          %v1224 = vmul.f32 -0.5, %v1134
          %v1225 = vadd.f32 %v1224, 1.0
          %v1226 = vmul.f32 %v1225, %v1134
          %v1227 = vand.u32 2147483647, %v1134
          %vm1228 = vcmp.lt.f32.partialorder %v1227, 0.0004427343
          %v1229 = vsel %vm1228, %v1226, %v1223
          %v1230 = vadd.f32 %v1136, 1.0
          %v1231 = vlog2.pop %v1230
          %v1232 = vmul.f32 %v1231, 0.6931472
          %v1233 = vmul.f32 -0.5, %v1136
          %v1234 = vadd.f32 %v1233, 1.0
          %v1235 = vmul.f32 %v1234, %v1136
          %v1236 = vand.u32 2147483647, %v1136
          %vm1237 = vcmp.lt.f32.partialorder %v1236, 0.0004427343
          %v1238 = vsel %vm1237, %v1235, %v1232
          %v1239 = vadd.f32 %v1138, 1.0
          %v1240 = vlog2.pop %v1239
          %v1241 = vmul.f32 %v1240, 0.6931472
          %v1242 = vmul.f32 -0.5, %v1138
          %v1243 = vadd.f32 %v1242, 1.0
          %v1244 = vmul.f32 %v1243, %v1138
          %v1245 = vand.u32 2147483647, %v1138
          %vm1246 = vcmp.lt.f32.partialorder %v1245, 0.0004427343
          %v1247 = vsel %vm1246, %v1244, %v1241
          %v1248 = vadd.f32 %v1140, 1.0
          %v1249 = vlog2.pop %v1248
          %v1250 = vmul.f32 %v1249, 0.6931472
          %v1251 = vmul.f32 -0.5, %v1140
          %v1252 = vadd.f32 %v1251, 1.0
          %v1253 = vmul.f32 %v1252, %v1140
          %v1254 = vand.u32 2147483647, %v1140
          %vm1255 = vcmp.lt.f32.partialorder %v1254, 0.0004427343
          %v1256 = vsel %vm1255, %v1253, %v1250
          %v1257 = vadd.f32 %v1142, 1.0
          %v1258 = vlog2.pop %v1257
          %v1259 = vmul.f32 %v1258, 0.6931472
          %v1260 = vmul.f32 -0.5, %v1142
          %v1261 = vadd.f32 %v1260, 1.0
          %v1262 = vmul.f32 %v1261, %v1142
          %v1263 = vand.u32 2147483647, %v1142
          %vm1264 = vcmp.lt.f32.partialorder %v1263, 0.0004427343
          %v1265 = vsel %vm1264, %v1262, %v1259
          %v1266 = vadd.f32 %v1144, 1.0
          %v1267 = vlog2.pop %v1266
          %v1268 = vmul.f32 %v1267, 0.6931472
          %v1269 = vmul.f32 -0.5, %v1144
          %v1270 = vadd.f32 %v1269, 1.0
          %v1271 = vmul.f32 %v1270, %v1144
          %v1272 = vand.u32 2147483647, %v1144
          %vm1273 = vcmp.lt.f32.partialorder %v1272, 0.0004427343
          %v1274 = vsel %vm1273, %v1271, %v1268
          %v1275 = vadd.f32 %v1146, 1.0
          %v1276 = vlog2.pop %v1275
          %v1277 = vmul.f32 %v1276, 0.6931472
          %v1278 = vmul.f32 -0.5, %v1146
          %v1279 = vadd.f32 %v1278, 1.0
          %v1280 = vmul.f32 %v1279, %v1146
          %v1281 = vand.u32 2147483647, %v1146
          %vm1282 = vcmp.lt.f32.partialorder %v1281, 0.0004427343
          %v1283 = vsel %vm1282, %v1280, %v1277
          %v1284 = vadd.f32 %v1148, 1.0
          %v1285 = vlog2.pop %v1284
          %v1286 = vmul.f32 %v1285, 0.6931472
          %v1287 = vmul.f32 -0.5, %v1148
          %v1288 = vadd.f32 %v1287, 1.0
          %v1289 = vmul.f32 %v1288, %v1148
          %v1290 = vand.u32 2147483647, %v1148
          %vm1291 = vcmp.lt.f32.partialorder %v1290, 0.0004427343
          %v1292 = vsel %vm1291, %v1289, %v1286
          %v1293 = vadd.f32 %v1069, %v1157
          %v1294 = vadd.f32 %v1070, %v1166
          %v1295 = vadd.f32 %v1071, %v1175
          %v1296 = vadd.f32 %v1072, %v1184
          %v1297 = vadd.f32 %v1073, %v1193
          %v1298 = vadd.f32 %v1074, %v1202
          %v1299 = vadd.f32 %v1075, %v1211
          %v1300 = vadd.f32 %v1076, %v1220
          %v1301 = vadd.f32 %v1077, %v1229
          %v1302 = vadd.f32 %v1078, %v1238
          %v1303 = vadd.f32 %v1079, %v1247
          %v1304 = vadd.f32 %v1080, %v1256
          %v1305 = vadd.f32 %v1081, %v1265
          %v1306 = vadd.f32 %v1082, %v1274
          %v1307 = vadd.f32 %v1083, %v1283
          %v1308 = vadd.f32 %v1084, %v1292
          %v1309 = vlaneseq
          %v1310 = vshrl.u32 %v1309, 7
          %v1311 = vadd.s32 %v1310, 8
          %v1312 = vadd.s32 %v1310, 16
          %v1313 = vadd.s32 %v1310, 24
          %v1314 = vadd.s32 %v1310, 32
          %v1315 = vadd.s32 %v1310, 40
          %v1316 = vadd.s32 %v1310, 48
          %v1317 = vadd.s32 %v1310, 56
          %v1318 = vadd.s32 %v1310, 64
          %v1319 = vadd.s32 %v1310, 72
          %v1320 = vadd.s32 %v1310, 80
          %v1321 = vadd.s32 %v1310, 88
          %v1322 = vadd.s32 %v1310, 96
          %v1323 = vadd.s32 %v1310, 104
          %v1324 = vadd.s32 %v1310, 112
          %v1325 = vadd.s32 %v1310, 120
          %v1326 = vstv %s868
          %v1327 = vadd.s32 %v1326, %v1310
          %v1328 = vadd.s32 %v1326, %v1311
          %v1329 = vadd.s32 %v1326, %v1312
          %v1330 = vadd.s32 %v1326, %v1313
          %v1331 = vadd.s32 %v1326, %v1314
          %v1332 = vadd.s32 %v1326, %v1315
          %v1333 = vadd.s32 %v1326, %v1316
          %v1334 = vadd.s32 %v1326, %v1317
          %v1335 = vadd.s32 %v1326, %v1318
          %v1336 = vadd.s32 %v1326, %v1319
          %v1337 = vadd.s32 %v1326, %v1320
          %v1338 = vadd.s32 %v1326, %v1321
          %v1339 = vadd.s32 %v1326, %v1322
          %v1340 = vadd.s32 %v1326, %v1323
          %v1341 = vadd.s32 %v1326, %v1324
          %v1342 = vadd.s32 %v1326, %v1325
          %vm1343 = vcmp.lt.s32.totalorder %v1327, 192
          %vm1344 = vcmp.lt.s32.totalorder %v1328, 192
          %vm1345 = vcmp.lt.s32.totalorder %v1329, 192
          %vm1346 = vcmp.lt.s32.totalorder %v1330, 192
          %vm1347 = vcmp.lt.s32.totalorder %v1331, 192
          %vm1348 = vcmp.lt.s32.totalorder %v1332, 192
          %vm1349 = vcmp.lt.s32.totalorder %v1333, 192
          %vm1350 = vcmp.lt.s32.totalorder %v1334, 192
          %vm1351 = vcmp.lt.s32.totalorder %v1335, 192
          %vm1352 = vcmp.lt.s32.totalorder %v1336, 192
          %vm1353 = vcmp.lt.s32.totalorder %v1337, 192
          %vm1354 = vcmp.lt.s32.totalorder %v1338, 192
          %vm1355 = vcmp.lt.s32.totalorder %v1339, 192
          %vm1356 = vcmp.lt.s32.totalorder %v1340, 192
          %vm1357 = vcmp.lt.s32.totalorder %v1341, 192
          %vm1358 = vcmp.lt.s32.totalorder %v1342, 192
          %v1359 = vsel %vm1343, %v1293, 0.0
          %v1360 = vsel %vm1344, %v1294, 0.0
          %v1361 = vsel %vm1345, %v1295, 0.0
          %v1362 = vsel %vm1346, %v1296, 0.0
          %v1363 = vsel %vm1347, %v1297, 0.0
          %v1364 = vsel %vm1348, %v1298, 0.0
          %v1365 = vsel %vm1349, %v1299, 0.0
          %v1366 = vsel %vm1350, %v1300, 0.0
          %v1367 = vsel %vm1351, %v1301, 0.0
          %v1368 = vsel %vm1352, %v1302, 0.0
          %v1369 = vsel %vm1353, %v1303, 0.0
          %v1370 = vsel %vm1354, %v1304, 0.0
          %v1371 = vsel %vm1355, %v1305, 0.0
          %v1372 = vsel %vm1356, %v1306, 0.0
          %v1373 = vsel %vm1357, %v1307, 0.0
          %v1374 = vsel %vm1358, %v1308, 0.0
          %v1375 = vld [vmem:[#allocation4] sm:$0x1]
          %vm1376 = vcmask 7168
          %v1377 = vsel %vm1376, %v1359, 0.0
          %v1378 = vsel %vm1376, %v1360, 0.0
          %v1379 = vadd.f32 %v1377, %v1378
          %v1380 = vsel %vm1376, %v1361, 0.0
          %v1381 = vadd.f32 %v1379, %v1380
          %v1382 = vsel %vm1376, %v1362, 0.0
          %v1383 = vadd.f32 %v1381, %v1382
          %v1384 = vsel %vm1376, %v1363, 0.0
          %v1385 = vadd.f32 %v1383, %v1384
          %v1386 = vsel %vm1376, %v1364, 0.0
          %v1387 = vadd.f32 %v1385, %v1386
          %v1388 = vsel %vm1376, %v1365, 0.0
          %v1389 = vadd.f32 %v1387, %v1388
          %v1390 = vsel %vm1376, %v1366, 0.0
          %v1391 = vadd.f32 %v1389, %v1390
          %v1392 = vsel %vm1376, %v1367, 0.0
          %v1393 = vadd.f32 %v1391, %v1392
          %v1394 = vsel %vm1376, %v1368, 0.0
          %v1395 = vadd.f32 %v1393, %v1394
          %v1396 = vsel %vm1376, %v1369, 0.0
          %v1397 = vadd.f32 %v1395, %v1396
          %v1398 = vsel %vm1376, %v1370, 0.0
          %v1399 = vadd.f32 %v1397, %v1398
          %v1400 = vsel %vm1376, %v1371, 0.0
          %v1401 = vadd.f32 %v1399, %v1400
          %v1402 = vsel %vm1376, %v1372, 0.0
          %v1403 = vadd.f32 %v1401, %v1402
          %v1404 = vsel %vm1376, %v1373, 0.0
          %v1405 = vadd.f32 %v1403, %v1404
          %v1406 = vsel %vm1376, %v1374, 0.0
          %v1407 = vadd.f32 %v1405, %v1406
          %1408 = vadd.xlane.f32.xlu0 %v1407
          %v1409 = vpop.xlane.xlu0 %1408
          %v1410 = vrot.slane %v1409, 4
          %v1411 = vadd.f32 %v1409, %v1410
          %v1412 = vrot.slane %v1411, 2
          %v1413 = vadd.f32 %v1411, %v1412
          %v1414 = vrot.slane %v1413, 1
          %v1415 = vadd.f32 %v1413, %v1414
          %s1416 = vtos %v1415
          %v1417 = vstv %s1416
          %v1418 = vadd.f32 %v1375, %v1417
          %vm1419 = vcmask 0
          %1420 = vst.msk [vmem:[#allocation4] sm:$0x1] %vm1419, %v1418
        $region64: #{tpu_custom_call.1} parent=35 // pred_fallthru
          _
        %p1421 = scmp.ge.s32.totalorder %s24, 4
        // Predicated region
        $region65: #{tpu_custom_call.1} parent=35 // pred_check
          %p1422 = pneg %p1421
        $region66: #{tpu_custom_call.1} parent=35 // pred_check_branch
          %1424 = sbr.rel (%p1422) target = $region68
        $region67: #{tpu_custom_call.1} parent=35 // pred_region
          %v1425 = vld [vmem:[%s271] sm:$0xff]
          %v1426 = vld [vmem:[%s271 + $0x8] sm:$0xff]
          %v1427 = vld [vmem:[%s271 + $0x10] sm:$0xff]
          %v1428 = vld [vmem:[%s271 + $0x18] sm:$0xff]
          %v1429 = vld [vmem:[%s271 + $0x20] sm:$0xff]
          %v1430 = vld [vmem:[%s271 + $0x28] sm:$0xff]
          %v1431 = vld [vmem:[%s271 + $0x30] sm:$0xff]
          %v1432 = vld [vmem:[%s271 + $0x38] sm:$0xff]
          %v1433 = vld [vmem:[%s271 + $0x40] sm:$0xff]
          %v1434 = vld [vmem:[%s271 + $0x48] sm:$0xff]
          %v1435 = vld [vmem:[%s271 + $0x50] sm:$0xff]
          %v1436 = vld [vmem:[%s271 + $0x58] sm:$0xff]
          %v1437 = vld [vmem:[%s271 + $0x60] sm:$0xff]
          %v1438 = vld [vmem:[%s271 + $0x68] sm:$0xff]
          %v1439 = vld [vmem:[%s271 + $0x70] sm:$0xff]
          %v1440 = vld [vmem:[%s271 + $0x78] sm:$0xff]
          %v1441 = vld [vmem:[%s271 + $0x80] sm:$0xff]
          %v1442 = vld [vmem:[%s271 + $0x88] sm:$0xff]
          %v1443 = vld [vmem:[%s271 + $0x90] sm:$0xff]
          %v1444 = vld [vmem:[%s271 + $0x98] sm:$0xff]
          %v1445 = vld [vmem:[%s271 + $0xa0] sm:$0xff]
          %v1446 = vld [vmem:[%s271 + $0xa8] sm:$0xff]
          %v1447 = vld [vmem:[%s271 + $0xb0] sm:$0xff]
          %v1448 = vld [vmem:[%s271 + $0xb8] sm:$0xff]
          %v1449 = vld [vmem:[%s271 + $0xc0] sm:$0xff]
          %v1450 = vld [vmem:[%s271 + $0xc8] sm:$0xff]
          %v1451 = vld [vmem:[%s271 + $0xd0] sm:$0xff]
          %v1452 = vld [vmem:[%s271 + $0xd8] sm:$0xff]
          %v1453 = vld [vmem:[%s271 + $0xe0] sm:$0xff]
          %v1454 = vld [vmem:[%s271 + $0xe8] sm:$0xff]
          %v1455 = vld [vmem:[%s271 + $0xf0] sm:$0xff]
          %v1456 = vld [vmem:[%s271 + $0xf8] sm:$0xff]
          %s1457 = ssub.s32 %s24, 4
          %s1458 = smul.u32 %s1457, 128
          %v1459 = vld [vmem:[#allocation3] sm:$0xff]
          %v1460 = vld [vmem:[#allocation3 + $0x8] sm:$0xff]
          %v1461 = vld [vmem:[#allocation3 + $0x10] sm:$0xff]
          %v1462 = vld [vmem:[#allocation3 + $0x18] sm:$0xff]
          %v1463 = vld [vmem:[#allocation3 + $0x20] sm:$0xff]
          %v1464 = vld [vmem:[#allocation3 + $0x28] sm:$0xff]
          %v1465 = vld [vmem:[#allocation3 + $0x30] sm:$0xff]
          %v1466 = vld [vmem:[#allocation3 + $0x38] sm:$0xff]
          %v1467 = vld [vmem:[#allocation3 + $0x40] sm:$0xff]
          %v1468 = vld [vmem:[#allocation3 + $0x48] sm:$0xff]
          %v1469 = vld [vmem:[#allocation3 + $0x50] sm:$0xff]
          %v1470 = vld [vmem:[#allocation3 + $0x58] sm:$0xff]
          %v1471 = vld [vmem:[#allocation3 + $0x60] sm:$0xff]
          %v1472 = vld [vmem:[#allocation3 + $0x68] sm:$0xff]
          %v1473 = vld [vmem:[#allocation3 + $0x70] sm:$0xff]
          %v1474 = vld [vmem:[#allocation3 + $0x78] sm:$0xff]
          %v1475 = vld [vmem:[#allocation3 + $0x80] sm:$0xff]
          %v1476 = vld [vmem:[#allocation3 + $0x88] sm:$0xff]
          %v1477 = vld [vmem:[#allocation3 + $0x90] sm:$0xff]
          %v1478 = vld [vmem:[#allocation3 + $0x98] sm:$0xff]
          %v1479 = vld [vmem:[#allocation3 + $0xa0] sm:$0xff]
          %v1480 = vld [vmem:[#allocation3 + $0xa8] sm:$0xff]
          %v1481 = vld [vmem:[#allocation3 + $0xb0] sm:$0xff]
          %v1482 = vld [vmem:[#allocation3 + $0xb8] sm:$0xff]
          %v1483 = vld [vmem:[#allocation3 + $0xc0] sm:$0xff]
          %v1484 = vld [vmem:[#allocation3 + $0xc8] sm:$0xff]
          %v1485 = vld [vmem:[#allocation3 + $0xd0] sm:$0xff]
          %v1486 = vld [vmem:[#allocation3 + $0xd8] sm:$0xff]
          %v1487 = vld [vmem:[#allocation3 + $0xe0] sm:$0xff]
          %v1488 = vld [vmem:[#allocation3 + $0xe8] sm:$0xff]
          %v1489 = vld [vmem:[#allocation3 + $0xf0] sm:$0xff]
          %v1490 = vld [vmem:[#allocation3 + $0xf8] sm:$0xff]
          %v1491 = vld [vmem:[#allocation5] sm:$0x1]
          %v1493 = vlaneseq
          %v1494 = vshrl.u32 %v1493, 7
          %v1495 = vsub.s32 0, %v1494
          %v1496 = vrot.slane %v1491, %v1495
          %1498 = vmatprep.subr.mxu0 0.0
          %1499 = vmatpush1.msra.mxu0 %v1459
          %1500 = vmatprep.subr.mxu0 0.0
          %1501 = vmatpush1.msra.mxu0 %v1460
          %1502 = vmatprep.subr.mxu0 0.0
          %1503 = vmatpush1.msra.mxu0 %v1461
          %1504 = vmatprep.subr.mxu0 0.0
          %1505 = vmatpush1.msra.mxu0 %v1462
          %1506 = vmatprep.subr.mxu0 0.0
          %1507 = vmatpush1.msra.mxu0 %v1463
          %1508 = vmatprep.subr.mxu0 0.0
          %1509 = vmatpush1.msra.mxu0 %v1464
          %1510 = vmatprep.subr.mxu0 0.0
          %1511 = vmatpush1.msra.mxu0 %v1465
          %1512 = vmatprep.subr.mxu0 0.0
          %1513 = vmatpush1.msra.mxu0 %v1466
          %1514 = vmatprep.subr.mxu0 0.0
          %1515 = vmatpush1.msra.mxu0 %v1467
          %1516 = vmatprep.subr.mxu0 0.0
          %1517 = vmatpush1.msra.mxu0 %v1468
          %1518 = vmatprep.subr.mxu0 0.0
          %1519 = vmatpush1.msra.mxu0 %v1469
          %1520 = vmatprep.subr.mxu0 0.0
          %1521 = vmatpush1.msra.mxu0 %v1470
          %1522 = vmatprep.subr.mxu0 0.0
          %1523 = vmatpush1.msra.mxu0 %v1471
          %1524 = vmatprep.subr.mxu0 0.0
          %1525 = vmatpush1.msra.mxu0 %v1472
          %1526 = vmatprep.subr.mxu0 0.0
          %1527 = vmatpush1.msra.mxu0 %v1473
          %1528 = vmatprep.subr.mxu0 0.0
          %1529 = vmatpush1.msra.mxu0 %v1474
          %1530 = vmatprep.subr.mxu0 0.0
          %1531 = vmatpush1.msra.mxu0 %v1475
          %1532 = vmatprep.subr.mxu0 0.0
          %1533 = vmatpush1.msra.mxu0 %v1476
          %1534 = vmatprep.subr.mxu0 0.0
          %1535 = vmatpush1.msra.mxu0 %v1477
          %1536 = vmatprep.subr.mxu0 0.0
          %1537 = vmatpush1.msra.mxu0 %v1478
          %1538 = vmatprep.subr.mxu0 0.0
          %1539 = vmatpush1.msra.mxu0 %v1479
          %1540 = vmatprep.subr.mxu0 0.0
          %1541 = vmatpush1.msra.mxu0 %v1480
          %1542 = vmatprep.subr.mxu0 0.0
          %1543 = vmatpush1.msra.mxu0 %v1481
          %1544 = vmatprep.subr.mxu0 0.0
          %1545 = vmatpush1.msra.mxu0 %v1482
          %1546 = vmatprep.subr.mxu0 0.0
          %1547 = vmatpush1.msra.mxu0 %v1483
          %1548 = vmatprep.subr.mxu0 0.0
          %1549 = vmatpush1.msra.mxu0 %v1484
          %1550 = vmatprep.subr.mxu0 0.0
          %1551 = vmatpush1.msra.mxu0 %v1485
          %1552 = vmatprep.subr.mxu0 0.0
          %1553 = vmatpush1.msra.mxu0 %v1486
          %1554 = vmatprep.subr.mxu0 0.0
          %1555 = vmatpush1.msra.mxu0 %v1487
          %1556 = vmatprep.subr.mxu0 0.0
          %1557 = vmatpush1.msra.mxu0 %v1488
          %1558 = vmatprep.subr.mxu0 0.0
          %1559 = vmatpush1.msra.mxu0 %v1489
          %1560 = vmatprep.subr.mxu0 0.0
          %1561 = vmatpush1.msra.mxu0 %v1490
          %1562 = vmatprep.mubr.f32.mxu0 %v1426
          %1563 = vmatmul.mubr.f32.gmra.mrb[0].mxu0 %v1425
          %v1564 = vpop.f32.mrb[0].mxu0
          %v1565 = vadd.f32 %v1496, %v1564
          %v1566 = vpop.f32.mrb[0].mxu0
          %1567 = vmatprep.mubr.f32.mxu0 %v1428
          %1568 = vmatmul.mubr.f32.gmra.mrb[0].mxu0 %v1427
          %v1569 = vpop.f32.mrb[0].mxu0
          %v1570 = vadd.f32 %v1496, %v1569
          %v1571 = vpop.f32.mrb[0].mxu0
          %1572 = vmatprep.mubr.f32.mxu0 %v1430
          %1573 = vmatmul.mubr.f32.gmra.mrb[0].mxu0 %v1429
          %v1574 = vpop.f32.mrb[0].mxu0
          %v1575 = vadd.f32 %v1496, %v1574
          %v1576 = vpop.f32.mrb[0].mxu0
          %1577 = vmatprep.mubr.f32.mxu0 %v1432
          %1578 = vmatmul.mubr.f32.gmra.mrb[0].mxu0 %v1431
          %v1579 = vpop.f32.mrb[0].mxu0
          %v1580 = vadd.f32 %v1496, %v1579
          %v1581 = vpop.f32.mrb[0].mxu0
          %1582 = vmatprep.mubr.f32.mxu0 %v1434
          %1583 = vmatmul.mubr.f32.gmra.mrb[0].mxu0 %v1433
          %v1584 = vpop.f32.mrb[0].mxu0
          %v1585 = vadd.f32 %v1496, %v1584
          %v1586 = vpop.f32.mrb[0].mxu0
          %1587 = vmatprep.mubr.f32.mxu0 %v1436
          %1588 = vmatmul.mubr.f32.gmra.mrb[0].mxu0 %v1435
          %v1589 = vpop.f32.mrb[0].mxu0
          %v1590 = vadd.f32 %v1496, %v1589
          %v1591 = vpop.f32.mrb[0].mxu0
          %1592 = vmatprep.mubr.f32.mxu0 %v1438
          %1593 = vmatmul.mubr.f32.gmra.mrb[0].mxu0 %v1437
          %v1594 = vpop.f32.mrb[0].mxu0
          %v1595 = vadd.f32 %v1496, %v1594
          %v1596 = vpop.f32.mrb[0].mxu0
          %1597 = vmatprep.mubr.f32.mxu0 %v1440
          %1598 = vmatmul.mubr.f32.gmra.mrb[0].mxu0 %v1439
          %v1599 = vpop.f32.mrb[0].mxu0
          %v1600 = vadd.f32 %v1496, %v1599
          %v1601 = vpop.f32.mrb[0].mxu0
          %1602 = vmatprep.mubr.f32.mxu0 %v1442
          %1603 = vmatmul.mubr.f32.gmra.mrb[0].mxu0 %v1441
          %v1604 = vpop.f32.mrb[0].mxu0
          %v1605 = vadd.f32 %v1496, %v1604
          %v1606 = vpop.f32.mrb[0].mxu0
          %1607 = vmatprep.mubr.f32.mxu0 %v1444
          %1608 = vmatmul.mubr.f32.gmra.mrb[0].mxu0 %v1443
          %v1609 = vpop.f32.mrb[0].mxu0
          %v1610 = vadd.f32 %v1496, %v1609
          %v1611 = vpop.f32.mrb[0].mxu0
          %1612 = vmatprep.mubr.f32.mxu0 %v1446
          %1613 = vmatmul.mubr.f32.gmra.mrb[0].mxu0 %v1445
          %v1614 = vpop.f32.mrb[0].mxu0
          %v1615 = vadd.f32 %v1496, %v1614
          %v1616 = vpop.f32.mrb[0].mxu0
          %1617 = vmatprep.mubr.f32.mxu0 %v1448
          %1618 = vmatmul.mubr.f32.gmra.mrb[0].mxu0 %v1447
          %v1619 = vpop.f32.mrb[0].mxu0
          %v1620 = vadd.f32 %v1496, %v1619
          %v1621 = vpop.f32.mrb[0].mxu0
          %1622 = vmatprep.mubr.f32.mxu0 %v1450
          %1623 = vmatmul.mubr.f32.gmra.mrb[0].mxu0 %v1449
          %v1624 = vpop.f32.mrb[0].mxu0
          %v1625 = vadd.f32 %v1496, %v1624
          %v1626 = vpop.f32.mrb[0].mxu0
          %1627 = vmatprep.mubr.f32.mxu0 %v1452
          %1628 = vmatmul.mubr.f32.gmra.mrb[0].mxu0 %v1451
          %v1629 = vpop.f32.mrb[0].mxu0
          %v1630 = vadd.f32 %v1496, %v1629
          %v1631 = vpop.f32.mrb[0].mxu0
          %1632 = vmatprep.mubr.f32.mxu0 %v1454
          %1633 = vmatmul.mubr.f32.gmra.mrb[0].mxu0 %v1453
          %v1634 = vpop.f32.mrb[0].mxu0
          %v1635 = vadd.f32 %v1496, %v1634
          %v1636 = vpop.f32.mrb[0].mxu0
          %1637 = vmatprep.mubr.f32.mxu0 %v1456
          %1638 = vmatmul.mubr.f32.gmra.mrb[0].mxu0 %v1455
          %v1639 = vpop.f32.mrb[0].mxu0
          %v1640 = vadd.f32 %v1496, %v1639
          %v1641 = vpop.f32.mrb[0].mxu0
          %1642 = vdwg.mxu0
          %v1643 = vmax.f32 %v1565, 0.0
          %v1644 = vmax.f32 %v1570, 0.0
          %v1645 = vmax.f32 %v1575, 0.0
          %v1646 = vmax.f32 %v1580, 0.0
          %v1647 = vmax.f32 %v1585, 0.0
          %v1648 = vmax.f32 %v1590, 0.0
          %v1649 = vmax.f32 %v1595, 0.0
          %v1650 = vmax.f32 %v1600, 0.0
          %v1651 = vmax.f32 %v1605, 0.0
          %v1652 = vmax.f32 %v1610, 0.0
          %v1653 = vmax.f32 %v1615, 0.0
          %v1654 = vmax.f32 %v1620, 0.0
          %v1655 = vmax.f32 %v1625, 0.0
          %v1656 = vmax.f32 %v1630, 0.0
          %v1657 = vmax.f32 %v1635, 0.0
          %v1658 = vmax.f32 %v1640, 0.0
          %v1659 = vand.u32 2147483647, %v1565
          %v1660 = vand.u32 2147483647, %v1570
          %v1661 = vand.u32 2147483647, %v1575
          %v1662 = vand.u32 2147483647, %v1580
          %v1663 = vand.u32 2147483647, %v1585
          %v1664 = vand.u32 2147483647, %v1590
          %v1665 = vand.u32 2147483647, %v1595
          %v1666 = vand.u32 2147483647, %v1600
          %v1667 = vand.u32 2147483647, %v1605
          %v1668 = vand.u32 2147483647, %v1610
          %v1669 = vand.u32 2147483647, %v1615
          %v1670 = vand.u32 2147483647, %v1620
          %v1671 = vand.u32 2147483647, %v1625
          %v1672 = vand.u32 2147483647, %v1630
          %v1673 = vand.u32 2147483647, %v1635
          %v1674 = vand.u32 2147483647, %v1640
          %v1675 = vsub.f32 0.0, %v1659
          %v1676 = vsub.f32 0.0, %v1660
          %v1677 = vsub.f32 0.0, %v1661
          %v1678 = vsub.f32 0.0, %v1662
          %v1679 = vsub.f32 0.0, %v1663
          %v1680 = vsub.f32 0.0, %v1664
          %v1681 = vsub.f32 0.0, %v1665
          %v1682 = vsub.f32 0.0, %v1666
          %v1683 = vsub.f32 0.0, %v1667
          %v1684 = vsub.f32 0.0, %v1668
          %v1685 = vsub.f32 0.0, %v1669
          %v1686 = vsub.f32 0.0, %v1670
          %v1687 = vsub.f32 0.0, %v1671
          %v1688 = vsub.f32 0.0, %v1672
          %v1689 = vsub.f32 0.0, %v1673
          %v1690 = vsub.f32 0.0, %v1674
          %v1691 = vmul.f32 %v1675, 1.442695
          %v1692 = vpow.pop %v1691
          %v1693 = vmul.f32 %v1676, 1.442695
          %v1694 = vpow.pop %v1693
          %v1695 = vmul.f32 %v1677, 1.442695
          %v1696 = vpow.pop %v1695
          %v1697 = vmul.f32 %v1678, 1.442695
          %v1698 = vpow.pop %v1697
          %v1699 = vmul.f32 %v1679, 1.442695
          %v1700 = vpow.pop %v1699
          %v1701 = vmul.f32 %v1680, 1.442695
          %v1702 = vpow.pop %v1701
          %v1703 = vmul.f32 %v1681, 1.442695
          %v1704 = vpow.pop %v1703
          %v1705 = vmul.f32 %v1682, 1.442695
          %v1706 = vpow.pop %v1705
          %v1707 = vmul.f32 %v1683, 1.442695
          %v1708 = vpow.pop %v1707
          %v1709 = vmul.f32 %v1684, 1.442695
          %v1710 = vpow.pop %v1709
          %v1711 = vmul.f32 %v1685, 1.442695
          %v1712 = vpow.pop %v1711
          %v1713 = vmul.f32 %v1686, 1.442695
          %v1714 = vpow.pop %v1713
          %v1715 = vmul.f32 %v1687, 1.442695
          %v1716 = vpow.pop %v1715
          %v1717 = vmul.f32 %v1688, 1.442695
          %v1718 = vpow.pop %v1717
          %v1719 = vmul.f32 %v1689, 1.442695
          %v1720 = vpow.pop %v1719
          %v1721 = vmul.f32 %v1690, 1.442695
          %v1722 = vpow.pop %v1721
          %v1723 = vadd.f32 %v1692, 1.0
          %v1724 = vlog2.pop %v1723
          %v1725 = vmul.f32 %v1724, 0.6931472
          %v1726 = vmul.f32 -0.5, %v1692
          %v1727 = vadd.f32 %v1726, 1.0
          %v1728 = vmul.f32 %v1727, %v1692
          %v1729 = vand.u32 2147483647, %v1692
          %vm1730 = vcmp.lt.f32.partialorder %v1729, 0.0004427343
          %v1731 = vsel %vm1730, %v1728, %v1725
          %v1732 = vadd.f32 %v1694, 1.0
          %v1733 = vlog2.pop %v1732
          %v1734 = vmul.f32 %v1733, 0.6931472
          %v1735 = vmul.f32 -0.5, %v1694
          %v1736 = vadd.f32 %v1735, 1.0
          %v1737 = vmul.f32 %v1736, %v1694
          %v1738 = vand.u32 2147483647, %v1694
          %vm1739 = vcmp.lt.f32.partialorder %v1738, 0.0004427343
          %v1740 = vsel %vm1739, %v1737, %v1734
          %v1741 = vadd.f32 %v1696, 1.0
          %v1742 = vlog2.pop %v1741
          %v1743 = vmul.f32 %v1742, 0.6931472
          %v1744 = vmul.f32 -0.5, %v1696
          %v1745 = vadd.f32 %v1744, 1.0
          %v1746 = vmul.f32 %v1745, %v1696
          %v1747 = vand.u32 2147483647, %v1696
          %vm1748 = vcmp.lt.f32.partialorder %v1747, 0.0004427343
          %v1749 = vsel %vm1748, %v1746, %v1743
          %v1750 = vadd.f32 %v1698, 1.0
          %v1751 = vlog2.pop %v1750
          %v1752 = vmul.f32 %v1751, 0.6931472
          %v1753 = vmul.f32 -0.5, %v1698
          %v1754 = vadd.f32 %v1753, 1.0
          %v1755 = vmul.f32 %v1754, %v1698
          %v1756 = vand.u32 2147483647, %v1698
          %vm1757 = vcmp.lt.f32.partialorder %v1756, 0.0004427343
          %v1758 = vsel %vm1757, %v1755, %v1752
          %v1759 = vadd.f32 %v1700, 1.0
          %v1760 = vlog2.pop %v1759
          %v1761 = vmul.f32 %v1760, 0.6931472
          %v1762 = vmul.f32 -0.5, %v1700
          %v1763 = vadd.f32 %v1762, 1.0
          %v1764 = vmul.f32 %v1763, %v1700
          %v1765 = vand.u32 2147483647, %v1700
          %vm1766 = vcmp.lt.f32.partialorder %v1765, 0.0004427343
          %v1767 = vsel %vm1766, %v1764, %v1761
          %v1768 = vadd.f32 %v1702, 1.0
          %v1769 = vlog2.pop %v1768
          %v1770 = vmul.f32 %v1769, 0.6931472
          %v1771 = vmul.f32 -0.5, %v1702
          %v1772 = vadd.f32 %v1771, 1.0
          %v1773 = vmul.f32 %v1772, %v1702
          %v1774 = vand.u32 2147483647, %v1702
          %vm1775 = vcmp.lt.f32.partialorder %v1774, 0.0004427343
          %v1776 = vsel %vm1775, %v1773, %v1770
          %v1777 = vadd.f32 %v1704, 1.0
          %v1778 = vlog2.pop %v1777
          %v1779 = vmul.f32 %v1778, 0.6931472
          %v1780 = vmul.f32 -0.5, %v1704
          %v1781 = vadd.f32 %v1780, 1.0
          %v1782 = vmul.f32 %v1781, %v1704
          %v1783 = vand.u32 2147483647, %v1704
          %vm1784 = vcmp.lt.f32.partialorder %v1783, 0.0004427343
          %v1785 = vsel %vm1784, %v1782, %v1779
          %v1786 = vadd.f32 %v1706, 1.0
          %v1787 = vlog2.pop %v1786
          %v1788 = vmul.f32 %v1787, 0.6931472
          %v1789 = vmul.f32 -0.5, %v1706
          %v1790 = vadd.f32 %v1789, 1.0
          %v1791 = vmul.f32 %v1790, %v1706
          %v1792 = vand.u32 2147483647, %v1706
          %vm1793 = vcmp.lt.f32.partialorder %v1792, 0.0004427343
          %v1794 = vsel %vm1793, %v1791, %v1788
          %v1795 = vadd.f32 %v1708, 1.0
          %v1796 = vlog2.pop %v1795
          %v1797 = vmul.f32 %v1796, 0.6931472
          %v1798 = vmul.f32 -0.5, %v1708
          %v1799 = vadd.f32 %v1798, 1.0
          %v1800 = vmul.f32 %v1799, %v1708
          %v1801 = vand.u32 2147483647, %v1708
          %vm1802 = vcmp.lt.f32.partialorder %v1801, 0.0004427343
          %v1803 = vsel %vm1802, %v1800, %v1797
          %v1804 = vadd.f32 %v1710, 1.0
          %v1805 = vlog2.pop %v1804
          %v1806 = vmul.f32 %v1805, 0.6931472
          %v1807 = vmul.f32 -0.5, %v1710
          %v1808 = vadd.f32 %v1807, 1.0
          %v1809 = vmul.f32 %v1808, %v1710
          %v1810 = vand.u32 2147483647, %v1710
          %vm1811 = vcmp.lt.f32.partialorder %v1810, 0.0004427343
          %v1812 = vsel %vm1811, %v1809, %v1806
          %v1813 = vadd.f32 %v1712, 1.0
          %v1814 = vlog2.pop %v1813
          %v1815 = vmul.f32 %v1814, 0.6931472
          %v1816 = vmul.f32 -0.5, %v1712
          %v1817 = vadd.f32 %v1816, 1.0
          %v1818 = vmul.f32 %v1817, %v1712
          %v1819 = vand.u32 2147483647, %v1712
          %vm1820 = vcmp.lt.f32.partialorder %v1819, 0.0004427343
          %v1821 = vsel %vm1820, %v1818, %v1815
          %v1822 = vadd.f32 %v1714, 1.0
          %v1823 = vlog2.pop %v1822
          %v1824 = vmul.f32 %v1823, 0.6931472
          %v1825 = vmul.f32 -0.5, %v1714
          %v1826 = vadd.f32 %v1825, 1.0
          %v1827 = vmul.f32 %v1826, %v1714
          %v1828 = vand.u32 2147483647, %v1714
          %vm1829 = vcmp.lt.f32.partialorder %v1828, 0.0004427343
          %v1830 = vsel %vm1829, %v1827, %v1824
          %v1831 = vadd.f32 %v1716, 1.0
          %v1832 = vlog2.pop %v1831
          %v1833 = vmul.f32 %v1832, 0.6931472
          %v1834 = vmul.f32 -0.5, %v1716
          %v1835 = vadd.f32 %v1834, 1.0
          %v1836 = vmul.f32 %v1835, %v1716
          %v1837 = vand.u32 2147483647, %v1716
          %vm1838 = vcmp.lt.f32.partialorder %v1837, 0.0004427343
          %v1839 = vsel %vm1838, %v1836, %v1833
          %v1840 = vadd.f32 %v1718, 1.0
          %v1841 = vlog2.pop %v1840
          %v1842 = vmul.f32 %v1841, 0.6931472
          %v1843 = vmul.f32 -0.5, %v1718
          %v1844 = vadd.f32 %v1843, 1.0
          %v1845 = vmul.f32 %v1844, %v1718
          %v1846 = vand.u32 2147483647, %v1718
          %vm1847 = vcmp.lt.f32.partialorder %v1846, 0.0004427343
          %v1848 = vsel %vm1847, %v1845, %v1842
          %v1849 = vadd.f32 %v1720, 1.0
          %v1850 = vlog2.pop %v1849
          %v1851 = vmul.f32 %v1850, 0.6931472
          %v1852 = vmul.f32 -0.5, %v1720
          %v1853 = vadd.f32 %v1852, 1.0
          %v1854 = vmul.f32 %v1853, %v1720
          %v1855 = vand.u32 2147483647, %v1720
          %vm1856 = vcmp.lt.f32.partialorder %v1855, 0.0004427343
          %v1857 = vsel %vm1856, %v1854, %v1851
          %v1858 = vadd.f32 %v1722, 1.0
          %v1859 = vlog2.pop %v1858
          %v1860 = vmul.f32 %v1859, 0.6931472
          %v1861 = vmul.f32 -0.5, %v1722
          %v1862 = vadd.f32 %v1861, 1.0
          %v1863 = vmul.f32 %v1862, %v1722
          %v1864 = vand.u32 2147483647, %v1722
          %vm1865 = vcmp.lt.f32.partialorder %v1864, 0.0004427343
          %v1866 = vsel %vm1865, %v1863, %v1860
          %v1867 = vadd.f32 %v1643, %v1731
          %v1868 = vadd.f32 %v1644, %v1740
          %v1869 = vadd.f32 %v1645, %v1749
          %v1870 = vadd.f32 %v1646, %v1758
          %v1871 = vadd.f32 %v1647, %v1767
          %v1872 = vadd.f32 %v1648, %v1776
          %v1873 = vadd.f32 %v1649, %v1785
          %v1874 = vadd.f32 %v1650, %v1794
          %v1875 = vadd.f32 %v1651, %v1803
          %v1876 = vadd.f32 %v1652, %v1812
          %v1877 = vadd.f32 %v1653, %v1821
          %v1878 = vadd.f32 %v1654, %v1830
          %v1879 = vadd.f32 %v1655, %v1839
          %v1880 = vadd.f32 %v1656, %v1848
          %v1881 = vadd.f32 %v1657, %v1857
          %v1882 = vadd.f32 %v1658, %v1866
          %v1883 = vlaneseq
          %v1884 = vshrl.u32 %v1883, 7
          %v1885 = vadd.s32 %v1884, 8
          %v1886 = vadd.s32 %v1884, 16
          %v1887 = vadd.s32 %v1884, 24
          %v1888 = vadd.s32 %v1884, 32
          %v1889 = vadd.s32 %v1884, 40
          %v1890 = vadd.s32 %v1884, 48
          %v1891 = vadd.s32 %v1884, 56
          %v1892 = vadd.s32 %v1884, 64
          %v1893 = vadd.s32 %v1884, 72
          %v1894 = vadd.s32 %v1884, 80
          %v1895 = vadd.s32 %v1884, 88
          %v1896 = vadd.s32 %v1884, 96
          %v1897 = vadd.s32 %v1884, 104
          %v1898 = vadd.s32 %v1884, 112
          %v1899 = vadd.s32 %v1884, 120
          %v1900 = vstv %s1458
          %v1901 = vadd.s32 %v1900, %v1884
          %v1902 = vadd.s32 %v1900, %v1885
          %v1903 = vadd.s32 %v1900, %v1886
          %v1904 = vadd.s32 %v1900, %v1887
          %v1905 = vadd.s32 %v1900, %v1888
          %v1906 = vadd.s32 %v1900, %v1889
          %v1907 = vadd.s32 %v1900, %v1890
          %v1908 = vadd.s32 %v1900, %v1891
          %v1909 = vadd.s32 %v1900, %v1892
          %v1910 = vadd.s32 %v1900, %v1893
          %v1911 = vadd.s32 %v1900, %v1894
          %v1912 = vadd.s32 %v1900, %v1895
          %v1913 = vadd.s32 %v1900, %v1896
          %v1914 = vadd.s32 %v1900, %v1897
          %v1915 = vadd.s32 %v1900, %v1898
          %v1916 = vadd.s32 %v1900, %v1899
          %vm1917 = vcmp.lt.s32.totalorder %v1901, 320
          %vm1918 = vcmp.lt.s32.totalorder %v1902, 320
          %vm1919 = vcmp.lt.s32.totalorder %v1903, 320
          %vm1920 = vcmp.lt.s32.totalorder %v1904, 320
          %vm1921 = vcmp.lt.s32.totalorder %v1905, 320
          %vm1922 = vcmp.lt.s32.totalorder %v1906, 320
          %vm1923 = vcmp.lt.s32.totalorder %v1907, 320
          %vm1924 = vcmp.lt.s32.totalorder %v1908, 320
          %vm1925 = vcmp.lt.s32.totalorder %v1909, 320
          %vm1926 = vcmp.lt.s32.totalorder %v1910, 320
          %vm1927 = vcmp.lt.s32.totalorder %v1911, 320
          %vm1928 = vcmp.lt.s32.totalorder %v1912, 320
          %vm1929 = vcmp.lt.s32.totalorder %v1913, 320
          %vm1930 = vcmp.lt.s32.totalorder %v1914, 320
          %vm1931 = vcmp.lt.s32.totalorder %v1915, 320
          %vm1932 = vcmp.lt.s32.totalorder %v1916, 320
          %v1933 = vsel %vm1917, %v1867, 0.0
          %v1934 = vsel %vm1918, %v1868, 0.0
          %v1935 = vsel %vm1919, %v1869, 0.0
          %v1936 = vsel %vm1920, %v1870, 0.0
          %v1937 = vsel %vm1921, %v1871, 0.0
          %v1938 = vsel %vm1922, %v1872, 0.0
          %v1939 = vsel %vm1923, %v1873, 0.0
          %v1940 = vsel %vm1924, %v1874, 0.0
          %v1941 = vsel %vm1925, %v1875, 0.0
          %v1942 = vsel %vm1926, %v1876, 0.0
          %v1943 = vsel %vm1927, %v1877, 0.0
          %v1944 = vsel %vm1928, %v1878, 0.0
          %v1945 = vsel %vm1929, %v1879, 0.0
          %v1946 = vsel %vm1930, %v1880, 0.0
          %v1947 = vsel %vm1931, %v1881, 0.0
          %v1948 = vsel %vm1932, %v1882, 0.0
          %v1949 = vld [vmem:[#allocation4] sm:$0x1]
          %vm1950 = vcmask 7168
          %v1951 = vsel %vm1950, %v1933, 0.0
          %v1952 = vsel %vm1950, %v1934, 0.0
          %v1953 = vadd.f32 %v1951, %v1952
          %v1954 = vsel %vm1950, %v1935, 0.0
          %v1955 = vadd.f32 %v1953, %v1954
          %v1956 = vsel %vm1950, %v1936, 0.0
          %v1957 = vadd.f32 %v1955, %v1956
          %v1958 = vsel %vm1950, %v1937, 0.0
          %v1959 = vadd.f32 %v1957, %v1958
          %v1960 = vsel %vm1950, %v1938, 0.0
          %v1961 = vadd.f32 %v1959, %v1960
          %v1962 = vsel %vm1950, %v1939, 0.0
          %v1963 = vadd.f32 %v1961, %v1962
          %v1964 = vsel %vm1950, %v1940, 0.0
          %v1965 = vadd.f32 %v1963, %v1964
          %v1966 = vsel %vm1950, %v1941, 0.0
          %v1967 = vadd.f32 %v1965, %v1966
          %v1968 = vsel %vm1950, %v1942, 0.0
          %v1969 = vadd.f32 %v1967, %v1968
          %v1970 = vsel %vm1950, %v1943, 0.0
          %v1971 = vadd.f32 %v1969, %v1970
          %v1972 = vsel %vm1950, %v1944, 0.0
          %v1973 = vadd.f32 %v1971, %v1972
          %v1974 = vsel %vm1950, %v1945, 0.0
          %v1975 = vadd.f32 %v1973, %v1974
          %v1976 = vsel %vm1950, %v1946, 0.0
          %v1977 = vadd.f32 %v1975, %v1976
          %v1978 = vsel %vm1950, %v1947, 0.0
          %v1979 = vadd.f32 %v1977, %v1978
          %v1980 = vsel %vm1950, %v1948, 0.0
          %v1981 = vadd.f32 %v1979, %v1980
          %1982 = vadd.xlane.f32.xlu0 %v1981
          %v1983 = vpop.xlane.xlu0 %1982
          %v1984 = vrot.slane %v1983, 4
          %v1985 = vadd.f32 %v1983, %v1984
          %v1986 = vrot.slane %v1985, 2
          %v1987 = vadd.f32 %v1985, %v1986
          %v1988 = vrot.slane %v1987, 1
          %v1989 = vadd.f32 %v1987, %v1988
          %s1990 = vtos %v1989
          %v1991 = vstv %s1990
          %v1992 = vadd.f32 %v1949, %v1991
          %vm1993 = vcmask 0
          %1994 = vst.msk [vmem:[#allocation4] sm:$0x1] %vm1993, %v1992
        $region68: #{tpu_custom_call.1} parent=35 // pred_fallthru
          _
        %p1995 = scmp.eq.s32.totalorder %s24, 6
        // Predicated region
        $region69: #{tpu_custom_call.1} parent=35 // pred_check
          %p1996 = pneg %p1995
        $region70: #{tpu_custom_call.1} parent=35 // pred_check_branch
          %1998 = sbr.rel (%p1996) target = $region72
        $region71: #{tpu_custom_call.1} parent=35 // pred_region
          %v1999 = vld [vmem:[#allocation4] sm:$0x1]
          %v2000 = vmul.f32 %v1999, 0.001953125
          %vm2001 = vcmask 0
          %2002 = vst.msk [vmem:[#allocation12] sm:$0x1] %vm2001, %v2000
        $region72: #{tpu_custom_call.1} parent=35 // pred_fallthru
          _
        // Predicated region
        $region73: #{tpu_custom_call.1} parent=35 // pred_check
          %p2003 = pneg %p147
        $region74: #{tpu_custom_call.1} parent=35 // pred_check_branch
          %2005 = sbr.rel (%p2003) target = $region76
        $region75: #{tpu_custom_call.1} parent=35 // pred_region
          %s2007 = ssub.s32 16, 16
          %2008 = vsyncadd [#allocation8], %s2007
          %s2010 = sshll.u32 [#allocation12], 4
          %s2011 = int_to_ptr.vmem [resolvable:$true] %s2010
          %2013 = dma.vmem_to_hbm [thread:$0]  %s2011, 16, %s4, [#allocation8]
        $region76: #{tpu_custom_call.1} parent=35 // pred_fallthru
          _
        // Predicated region
        $region77: #{tpu_custom_call.1} parent=35 // pred_check
          %p2014 = pneg %p147
        $region78: #{tpu_custom_call.1} parent=35 // pred_check_branch
          %2016 = sbr.rel (%p2014) target = $region80
        $region79: #{tpu_custom_call.1} parent=35 // pred_region
          %2017 = dma.done [#allocation8], 16
        $region80: #{tpu_custom_call.1} parent=35 // pred_fallthru
          _
      $region36: #{tpu_custom_call.1} parent=5 // pred_fallthru
        _
      %p2018 = scmp.le.s32.totalorder 2, %s19
      // Predicated region
      $region81: #{tpu_custom_call.1} parent=5 // pred_check
        %p2019 = pneg %p2018
      $region82: #{tpu_custom_call.1} parent=5 // pred_check_branch
        %2021 = sbr.rel (%p2019) target = $region84
      $region83: #{tpu_custom_call.1} parent=5 // pred_region
        %s2022 = ssub.s32 %s19, 2
      $region84: #{tpu_custom_call.1} parent=5 // pred_fallthru
        _
    $region6: #{tpu_custom_call.1} parent=1 // loop_footer
      %s23 = sadd.s32 1, %s19
    $region7: #{tpu_custom_call.1} parent=1 // loop_footer_branch
      %18 = sbr.rel target = $region3
    $region8: #{tpu_custom_call.1} parent=1 // loop_exit
      _
    %2023 = vsyncpa [#allocation7], 1
    %s2024 = scalar_lea.sflag [#allocation7], 1
    %2025 = vsyncpa %s2024, 1
    %2026 = vsyncpa [#allocation10], 1
    %s2027 = scalar_lea.sflag [#allocation10], 1
    %2028 = vsyncpa %s2027, 1
    %2029 = vsyncpa [#allocation8], 1
    %s2030 = scalar_lea.sflag [#allocation8], 1
    %2031 = vsyncpa %s2030, 1

</llo_original>
